<compile_context>
chip_gen: v7x
topology: tpu7x:2x2x1
jax: 0.10.0
libtpu: 0.0.40
codegen_flags: <defaults>
</compile_context>

<pallas_src>
import functools

import jax
import jax.numpy as jnp
from jax.experimental import pallas as pl
from jax.experimental.pallas import tpu as pltpu


# ----------------------------------------------------------------------------
# Kernel
# ----------------------------------------------------------------------------
def _actor_lstm_kernel(
    x_ref, h0_ref, c0_ref,
    w_ih_ref, w_hh_ref, b_ref,
    w_head_ref, b_head_ref,
    out_ref, hn_ref, cn_ref,
    *, hidden_dim: int, seq_len: int,
):
    H = hidden_dim

    # Input projection for all timesteps at once on the MXU (bf16 operands,
    # f32 accumulation). (T, 4H) = a handful of vregs; no scratch round trip.
    gx = (
        jnp.dot(x_ref[...], w_ih_ref[...], preferred_element_type=jnp.float32)
        + b_ref[...]
    )

    w_hh = w_hh_ref[...]                       # (H, 4H) bf16, loaded once

    h = h0_ref[...]                            # (1, H) f32
    c = c0_ref[...]                            # (1, H) f32
    hs = []

    # Fully unrolled recurrence — T is a small static constant.
    # TODO(synk): hold W_hh in MXU weight regs across steps
    # (pltpu.matmul_push_rhs / matmul_acc_lhs) as a further latency cut.
    for t in range(seq_len):
        gates = gx[t:t + 1, :] + jnp.dot(
            h.astype(jnp.bfloat16), w_hh, preferred_element_type=jnp.float32
        )                                       # (1, 4H) f32
        # Gate columns were permuted to [i, f, o, g]: one sigmoid over the
        # contiguous 3H block, one tanh for g (jax.nn.sigmoid lowers to the
        # EUP tanh path).
        sig = jax.nn.sigmoid(gates[:, 0:3 * H])
        i_g = sig[:, 0:H]
        f_g = sig[:, H:2 * H]
        o_g = sig[:, 2 * H:3 * H]
        g_g = jnp.tanh(gates[:, 3 * H:4 * H])
        c = f_g * c + i_g * g_g
        h = o_g * jnp.tanh(c)
        hs.append(h)

    hs_all = jnp.concatenate(hs, axis=0).astype(jnp.bfloat16)   # (T, H)

    # Fused + lane-padded output heads: one (T, >=128) matmul, unmasked stores.
    out_ref[...] = (
        jnp.dot(hs_all, w_head_ref[...], preferred_element_type=jnp.float32)
        + b_head_ref[...]
    )
    hn_ref[...] = h
    cn_ref[...] = c


# ----------------------------------------------------------------------------
# Param preparation (PyTorch layout -> kernel layout)
# ----------------------------------------------------------------------------
def prepare_kernel_params(params, hidden_dim, output_dim):
    """Permute gate columns [i,f,g,o]->[i,f,o,g], cast MXU operands to bf16,
    fuse + lane-pad the mu/logvar heads."""
    H, O = hidden_dim, output_dim

    def perm_cols(m):
        return jnp.concatenate(
            [m[..., 0:H], m[..., H:2 * H], m[..., 3 * H:4 * H], m[..., 2 * H:3 * H]],
            axis=-1,
        )

    w_ih = perm_cols(params["w_ih_t"]).astype(jnp.bfloat16)   # (in, 4H)
    w_hh = perm_cols(params["w_hh_t"]).astype(jnp.bfloat16)   # (H, 4H)
    b = perm_cols(params["b"]).astype(jnp.float32)            # (1, 4H)

    w_head = jnp.concatenate([params["w_mu_t"], params["w_lv_t"]], axis=1)  # (H, 2O)
    b_head = jnp.concatenate([params["b_mu"], params["b_lv"]], axis=1)      # (1, 2O)
    width = max(128, ((2 * O + 127) // 128) * 128)
    pad = width - 2 * O
    w_head = jnp.pad(w_head, ((0, 0), (0, pad))).astype(jnp.bfloat16)
    b_head = jnp.pad(b_head, ((0, 0), (0, pad))).astype(jnp.float32)

    return {
        "w_ih_t": w_ih, "w_hh_t": w_hh, "b": b,
        "w_head_t": w_head, "b_head": b_head, "head_width": width,
    }


# ----------------------------------------------------------------------------
# Wrapper
# ----------------------------------------------------------------------------
def actor_lstm_forward(x, hidden, params, output_dim):
    """Pallas equivalent of ActorLSTM.forward((x, hidden))."""
    h0, c0 = hidden
    T = x.shape[0]
    x2 = x.reshape(T, -1).astype(jnp.bfloat16)      # x.view(x.size(0), -1), bf16 for MXU
    H = params["w_hh_t"].shape[0]

    kp = prepare_kernel_params(params, H, output_dim)
    width = kp["head_width"]

    vmem = pl.BlockSpec(memory_space=pltpu.MemorySpace.VMEM)

    fn = pl.pallas_call(
        functools.partial(_actor_lstm_kernel, hidden_dim=H, seq_len=T),
        out_shape=(
            jax.ShapeDtypeStruct((T, width), jnp.float32),  # [mu | logvar | pad]
            jax.ShapeDtypeStruct((1, H), jnp.float32),      # h_n
            jax.ShapeDtypeStruct((1, H), jnp.float32),      # c_n
        ),
        in_specs=[vmem] * 8,
        out_specs=(vmem, vmem, vmem),
    )
    out, hn, cn = fn(
        x2,
        h0.astype(jnp.float32), c0.astype(jnp.float32),
        kp["w_ih_t"], kp["w_hh_t"], kp["b"],
        kp["w_head_t"], kp["b_head"],
    )
    mu = out[:, :output_dim]
    logvar = out[:, output_dim:2 * output_dim]
    return mu, logvar, (hn, cn)


# ----------------------------------------------------------------------------
# Pure-JAX reference (mirrors PyTorch LSTM + Linear math, f32, [i,f,g,o] order)
# ----------------------------------------------------------------------------
def reference_forward(x, hidden, params):
    h, c = hidden
    xf = x.reshape(x.shape[0], -1)
    H = params["w_hh_t"].shape[0]
    gx = xf @ params["w_ih_t"] + params["b"]
    hs = []
    for t in range(xf.shape[0]):
        gates = gx[t:t + 1] + h @ params["w_hh_t"]
        i = jax.nn.sigmoid(gates[:, 0:H])
        f = jax.nn.sigmoid(gates[:, H:2 * H])
        g = jnp.tanh(gates[:, 2 * H:3 * H])
        o = jax.nn.sigmoid(gates[:, 3 * H:4 * H])
        c = f * c + i * g
        h = o * jnp.tanh(c)
        hs.append(h)
    hs = jnp.concatenate(hs, axis=0)
    mu = hs @ params["w_mu_t"] + params["b_mu"]
    lv = hs @ params["w_lv_t"] + params["b_lv"]
    return mu, lv, (h, c)


def init_params(key, input_dim, hidden_dim, output_dim):
    """PyTorch-layout params (LSTM uniform(-1/sqrt(H), 1/sqrt(H)), gate order [i,f,g,o])."""
    ks = jax.random.split(key, 8)
    s = 1.0 / jnp.sqrt(hidden_dim)

    def u(k, shape, scale):
        return jax.random.uniform(k, shape, jnp.float32, -scale, scale)

    w_ih = u(ks[0], (4 * hidden_dim, input_dim), s)    # PyTorch weight_ih_l0
    w_hh = u(ks[1], (4 * hidden_dim, hidden_dim), s)   # PyTorch weight_hh_l0
    b_ih = u(ks[2], (4 * hidden_dim,), s)
    b_hh = u(ks[3], (4 * hidden_dim,), s)
    w_mu = u(ks[4], (output_dim, hidden_dim), s)
    b_mu = u(ks[5], (output_dim,), s)
    w_lv = u(ks[6], (output_dim, hidden_dim), s)
    b_lv = u(ks[7], (output_dim,), s)

    return {
        "w_ih_t": w_ih.T,                               # (input_dim, 4H)
        "w_hh_t": w_hh.T,                               # (H, 4H)
        "b": (b_ih + b_hh).reshape(1, 4 * hidden_dim),  # combined LSTM bias
        "w_mu_t": w_mu.T,                               # (H, O)
        "b_mu": b_mu.reshape(1, output_dim),
        "w_lv_t": w_lv.T,                               # (H, O)
        "b_lv": b_lv.reshape(1, output_dim),
    }


if __name__ == "__main__":
    T, C, F = 8, 4, 8            # raw input x: (T, C, F) -> flattened input_dim = 32
    input_dim = C * F
    hidden_dim = 128             # lane-aligned: each gate block is a clean 128-lane slice
    output_dim = 32

    key = jax.random.PRNGKey(0)
    kx, kh, kc, kp = jax.random.split(key, 4)
    x = jax.random.normal(kx, (T, C, F), jnp.float32)
    h0 = jax.random.normal(kh, (1, hidden_dim), jnp.float32)
    c0 = jax.random.normal(kc, (1, hidden_dim), jnp.float32)
    params = init_params(kp, input_dim, hidden_dim, output_dim)

    mu, logvar, (hn, cn) = actor_lstm_forward(x, (h0, c0), params, output_dim)
    jax.block_until_ready((mu, logvar, hn, cn))

    # Correctness check against the f32 pure-JAX reference (PyTorch layout).
    # Slightly relaxed tolerance to cover bf16 MXU operands.
    mu_r, lv_r, (hn_r, cn_r) = reference_forward(x, (h0, c0), params)
    assert mu.shape == (T, output_dim) and logvar.shape == (T, output_dim)
    assert hn.shape == (1, hidden_dim) and cn.shape == (1, hidden_dim)
    assert jnp.allclose(mu, mu_r, atol=2e-2, rtol=2e-2)
    assert jnp.allclose(logvar, lv_r, atol=2e-2, rtol=2e-2)
    assert jnp.allclose(hn, hn_r, atol=2e-2, rtol=2e-2)
    assert jnp.allclose(cn, cn_r, atol=2e-2, rtol=2e-2)

    print("KERNEL_OK")
</pallas_src>

<mosaic_0001>
module attributes {stable_mosaic.version = 11 : i64} {
  func.func @_actor_lstm_kernel(%arg0: memref<8x32xbf16, #tpu.memory_space<vmem>>, %arg1: memref<1x128xf32, #tpu.memory_space<vmem>>, %arg2: memref<1x128xf32, #tpu.memory_space<vmem>>, %arg3: memref<32x512xbf16, #tpu.memory_space<vmem>>, %arg4: memref<128x512xbf16, #tpu.memory_space<vmem>>, %arg5: memref<1x512xf32, #tpu.memory_space<vmem>>, %arg6: memref<128x128xbf16, #tpu.memory_space<vmem>>, %arg7: memref<1x128xf32, #tpu.memory_space<vmem>>, %arg8: memref<8x128xf32, #tpu.memory_space<vmem>>, %arg9: memref<1x128xf32, #tpu.memory_space<vmem>>, %arg10: memref<1x128xf32, #tpu.memory_space<vmem>>) attributes {dimension_semantics = [], scalar_prefetch = 0 : i64, scratch_operands = 0 : i64, tpu.core_type = #tpu.core_type<tc>} {
    %c0 = arith.constant 0 : index
    %c0_0 = arith.constant 0 : index
    %0 = vector.load %arg0[%c0, %c0_0] : memref<8x32xbf16, #tpu.memory_space<vmem>>, vector<8x32xbf16>
    %c0_1 = arith.constant 0 : index
    %c0_2 = arith.constant 0 : index
    %1 = vector.load %arg3[%c0_1, %c0_2] : memref<32x512xbf16, #tpu.memory_space<vmem>>, vector<32x512xbf16>
    %cst = arith.constant dense<0.000000e+00> : vector<8x512xf32>
    %2 = tpu.matmul %0, %1, %cst {dimension_numbers = #tpu.dot_dimension_numbers<[1], [0], [0], [1], [0, 0, 1, 1], [], []>} : vector<8x32xbf16>, vector<32x512xbf16>, vector<8x512xf32> -> vector<8x512xf32>
    %c0_3 = arith.constant 0 : index
    %c0_4 = arith.constant 0 : index
    %3 = vector.load %arg5[%c0_3, %c0_4] : memref<1x512xf32, #tpu.memory_space<vmem>>, vector<1x512xf32>
    %4 = vector.broadcast %3 : vector<1x512xf32> to vector<8x512xf32>
    %5 = arith.addf %2, %4 : vector<8x512xf32>
    %c0_5 = arith.constant 0 : index
    %c0_6 = arith.constant 0 : index
    %6 = vector.load %arg4[%c0_5, %c0_6] : memref<128x512xbf16, #tpu.memory_space<vmem>>, vector<128x512xbf16>
    %c0_7 = arith.constant 0 : index
    %c0_8 = arith.constant 0 : index
    %7 = vector.load %arg1[%c0_7, %c0_8] : memref<1x128xf32, #tpu.memory_space<vmem>>, vector<1x128xf32>
    %c0_9 = arith.constant 0 : index
    %c0_10 = arith.constant 0 : index
    %8 = vector.load %arg2[%c0_9, %c0_10] : memref<1x128xf32, #tpu.memory_space<vmem>>, vector<1x128xf32>
    %9 = vector.extract_strided_slice %5 {offsets = [0, 0], sizes = [1, 512], strides = [1, 1]} : vector<8x512xf32> to vector<1x512xf32>
    %10 = arith.truncf %7 : vector<1x128xf32> to vector<1x128xbf16>
    %cst_11 = arith.constant dense<0.000000e+00> : vector<1x512xf32>
    %11 = tpu.matmul %10, %6, %cst_11 {dimension_numbers = #tpu.dot_dimension_numbers<[1], [0], [0], [1], [0, 0, 1, 1], [], []>} : vector<1x128xbf16>, vector<128x512xbf16>, vector<1x512xf32> -> vector<1x512xf32>
    %12 = arith.addf %9, %11 : vector<1x512xf32>
    %13 = vector.extract_strided_slice %12 {offsets = [0, 0], sizes = [1, 384], strides = [1, 1]} : vector<1x512xf32> to vector<1x384xf32>
    %14 = arith.negf %13 : vector<1x384xf32>
    %15 = math.exp %14 : vector<1x384xf32>
    %cst_12 = arith.constant 1.000000e+00 : f32
    %16 = vector.broadcast %cst_12 : f32 to vector<1x384xf32>
    %17 = arith.addf %16, %15 : vector<1x384xf32>
    %18 = arith.divf %16, %17 : vector<1x384xf32>
    %19 = vector.extract_strided_slice %18 {offsets = [0, 0], sizes = [1, 128], strides = [1, 1]} : vector<1x384xf32> to vector<1x128xf32>
    %20 = vector.extract_strided_slice %18 {offsets = [0, 128], sizes = [1, 128], strides = [1, 1]} : vector<1x384xf32> to vector<1x128xf32>
    %21 = vector.extract_strided_slice %18 {offsets = [0, 256], sizes = [1, 128], strides = [1, 1]} : vector<1x384xf32> to vector<1x128xf32>
    %22 = vector.extract_strided_slice %12 {offsets = [0, 384], sizes = [1, 128], strides = [1, 1]} : vector<1x512xf32> to vector<1x128xf32>
    %23 = math.tanh %22 : vector<1x128xf32>
    %24 = arith.mulf %20, %8 : vector<1x128xf32>
    %25 = arith.mulf %19, %23 : vector<1x128xf32>
    %26 = arith.addf %24, %25 : vector<1x128xf32>
    %27 = math.tanh %26 : vector<1x128xf32>
    %28 = arith.mulf %21, %27 : vector<1x128xf32>
    %29 = vector.extract_strided_slice %5 {offsets = [1, 0], sizes = [1, 512], strides = [1, 1]} : vector<8x512xf32> to vector<1x512xf32>
    %30 = arith.truncf %28 : vector<1x128xf32> to vector<1x128xbf16>
    %cst_13 = arith.constant dense<0.000000e+00> : vector<1x512xf32>
    %31 = tpu.matmul %30, %6, %cst_13 {dimension_numbers = #tpu.dot_dimension_numbers<[1], [0], [0], [1], [0, 0, 1, 1], [], []>} : vector<1x128xbf16>, vector<128x512xbf16>, vector<1x512xf32> -> vector<1x512xf32>
    %32 = arith.addf %29, %31 : vector<1x512xf32>
    %33 = vector.extract_strided_slice %32 {offsets = [0, 0], sizes = [1, 384], strides = [1, 1]} : vector<1x512xf32> to vector<1x384xf32>
    %34 = arith.negf %33 : vector<1x384xf32>
    %35 = math.exp %34 : vector<1x384xf32>
    %cst_14 = arith.constant 1.000000e+00 : f32
    %36 = vector.broadcast %cst_14 : f32 to vector<1x384xf32>
    %37 = arith.addf %36, %35 : vector<1x384xf32>
    %38 = arith.divf %36, %37 : vector<1x384xf32>
    %39 = vector.extract_strided_slice %38 {offsets = [0, 0], sizes = [1, 128], strides = [1, 1]} : vector<1x384xf32> to vector<1x128xf32>
    %40 = vector.extract_strided_slice %38 {offsets = [0, 128], sizes = [1, 128], strides = [1, 1]} : vector<1x384xf32> to vector<1x128xf32>
    %41 = vector.extract_strided_slice %38 {offsets = [0, 256], sizes = [1, 128], strides = [1, 1]} : vector<1x384xf32> to vector<1x128xf32>
    %42 = vector.extract_strided_slice %32 {offsets = [0, 384], sizes = [1, 128], strides = [1, 1]} : vector<1x512xf32> to vector<1x128xf32>
    %43 = math.tanh %42 : vector<1x128xf32>
    %44 = arith.mulf %40, %26 : vector<1x128xf32>
    %45 = arith.mulf %39, %43 : vector<1x128xf32>
    %46 = arith.addf %44, %45 : vector<1x128xf32>
    %47 = math.tanh %46 : vector<1x128xf32>
    %48 = arith.mulf %41, %47 : vector<1x128xf32>
    %49 = vector.extract_strided_slice %5 {offsets = [2, 0], sizes = [1, 512], strides = [1, 1]} : vector<8x512xf32> to vector<1x512xf32>
    %50 = arith.truncf %48 : vector<1x128xf32> to vector<1x128xbf16>
    %cst_15 = arith.constant dense<0.000000e+00> : vector<1x512xf32>
    %51 = tpu.matmul %50, %6, %cst_15 {dimension_numbers = #tpu.dot_dimension_numbers<[1], [0], [0], [1], [0, 0, 1, 1], [], []>} : vector<1x128xbf16>, vector<128x512xbf16>, vector<1x512xf32> -> vector<1x512xf32>
    %52 = arith.addf %49, %51 : vector<1x512xf32>
    %53 = vector.extract_strided_slice %52 {offsets = [0, 0], sizes = [1, 384], strides = [1, 1]} : vector<1x512xf32> to vector<1x384xf32>
    %54 = arith.negf %53 : vector<1x384xf32>
    %55 = math.exp %54 : vector<1x384xf32>
    %cst_16 = arith.constant 1.000000e+00 : f32
    %56 = vector.broadcast %cst_16 : f32 to vector<1x384xf32>
    %57 = arith.addf %56, %55 : vector<1x384xf32>
    %58 = arith.divf %56, %57 : vector<1x384xf32>
    %59 = vector.extract_strided_slice %58 {offsets = [0, 0], sizes = [1, 128], strides = [1, 1]} : vector<1x384xf32> to vector<1x128xf32>
    %60 = vector.extract_strided_slice %58 {offsets = [0, 128], sizes = [1, 128], strides = [1, 1]} : vector<1x384xf32> to vector<1x128xf32>
    %61 = vector.extract_strided_slice %58 {offsets = [0, 256], sizes = [1, 128], strides = [1, 1]} : vector<1x384xf32> to vector<1x128xf32>
    %62 = vector.extract_strided_slice %52 {offsets = [0, 384], sizes = [1, 128], strides = [1, 1]} : vector<1x512xf32> to vector<1x128xf32>
    %63 = math.tanh %62 : vector<1x128xf32>
    %64 = arith.mulf %60, %46 : vector<1x128xf32>
    %65 = arith.mulf %59, %63 : vector<1x128xf32>
    %66 = arith.addf %64, %65 : vector<1x128xf32>
    %67 = math.tanh %66 : vector<1x128xf32>
    %68 = arith.mulf %61, %67 : vector<1x128xf32>
    %69 = vector.extract_strided_slice %5 {offsets = [3, 0], sizes = [1, 512], strides = [1, 1]} : vector<8x512xf32> to vector<1x512xf32>
    %70 = arith.truncf %68 : vector<1x128xf32> to vector<1x128xbf16>
    %cst_17 = arith.constant dense<0.000000e+00> : vector<1x512xf32>
    %71 = tpu.matmul %70, %6, %cst_17 {dimension_numbers = #tpu.dot_dimension_numbers<[1], [0], [0], [1], [0, 0, 1, 1], [], []>} : vector<1x128xbf16>, vector<128x512xbf16>, vector<1x512xf32> -> vector<1x512xf32>
    %72 = arith.addf %69, %71 : vector<1x512xf32>
    %73 = vector.extract_strided_slice %72 {offsets = [0, 0], sizes = [1, 384], strides = [1, 1]} : vector<1x512xf32> to vector<1x384xf32>
    %74 = arith.negf %73 : vector<1x384xf32>
    %75 = math.exp %74 : vector<1x384xf32>
    %cst_18 = arith.constant 1.000000e+00 : f32
    %76 = vector.broadcast %cst_18 : f32 to vector<1x384xf32>
    %77 = arith.addf %76, %75 : vector<1x384xf32>
    %78 = arith.divf %76, %77 : vector<1x384xf32>
    %79 = vector.extract_strided_slice %78 {offsets = [0, 0], sizes = [1, 128], strides = [1, 1]} : vector<1x384xf32> to vector<1x128xf32>
    %80 = vector.extract_strided_slice %78 {offsets = [0, 128], sizes = [1, 128], strides = [1, 1]} : vector<1x384xf32> to vector<1x128xf32>
    %81 = vector.extract_strided_slice %78 {offsets = [0, 256], sizes = [1, 128], strides = [1, 1]} : vector<1x384xf32> to vector<1x128xf32>
    %82 = vector.extract_strided_slice %72 {offsets = [0, 384], sizes = [1, 128], strides = [1, 1]} : vector<1x512xf32> to vector<1x128xf32>
    %83 = math.tanh %82 : vector<1x128xf32>
    %84 = arith.mulf %80, %66 : vector<1x128xf32>
    %85 = arith.mulf %79, %83 : vector<1x128xf32>
    %86 = arith.addf %84, %85 : vector<1x128xf32>
    %87 = math.tanh %86 : vector<1x128xf32>
    %88 = arith.mulf %81, %87 : vector<1x128xf32>
    %89 = vector.extract_strided_slice %5 {offsets = [4, 0], sizes = [1, 512], strides = [1, 1]} : vector<8x512xf32> to vector<1x512xf32>
    %90 = arith.truncf %88 : vector<1x128xf32> to vector<1x128xbf16>
    %cst_19 = arith.constant dense<0.000000e+00> : vector<1x512xf32>
    %91 = tpu.matmul %90, %6, %cst_19 {dimension_numbers = #tpu.dot_dimension_numbers<[1], [0], [0], [1], [0, 0, 1, 1], [], []>} : vector<1x128xbf16>, vector<128x512xbf16>, vector<1x512xf32> -> vector<1x512xf32>
    %92 = arith.addf %89, %91 : vector<1x512xf32>
    %93 = vector.extract_strided_slice %92 {offsets = [0, 0], sizes = [1, 384], strides = [1, 1]} : vector<1x512xf32> to vector<1x384xf32>
    %94 = arith.negf %93 : vector<1x384xf32>
    %95 = math.exp %94 : vector<1x384xf32>
    %cst_20 = arith.constant 1.000000e+00 : f32
    %96 = vector.broadcast %cst_20 : f32 to vector<1x384xf32>
    %97 = arith.addf %96, %95 : vector<1x384xf32>
    %98 = arith.divf %96, %97 : vector<1x384xf32>
    %99 = vector.extract_strided_slice %98 {offsets = [0, 0], sizes = [1, 128], strides = [1, 1]} : vector<1x384xf32> to vector<1x128xf32>
    %100 = vector.extract_strided_slice %98 {offsets = [0, 128], sizes = [1, 128], strides = [1, 1]} : vector<1x384xf32> to vector<1x128xf32>
    %101 = vector.extract_strided_slice %98 {offsets = [0, 256], sizes = [1, 128], strides = [1, 1]} : vector<1x384xf32> to vector<1x128xf32>
    %102 = vector.extract_strided_slice %92 {offsets = [0, 384], sizes = [1, 128], strides = [1, 1]} : vector<1x512xf32> to vector<1x128xf32>
    %103 = math.tanh %102 : vector<1x128xf32>
    %104 = arith.mulf %100, %86 : vector<1x128xf32>
    %105 = arith.mulf %99, %103 : vector<1x128xf32>
    %106 = arith.addf %104, %105 : vector<1x128xf32>
    %107 = math.tanh %106 : vector<1x128xf32>
    %108 = arith.mulf %101, %107 : vector<1x128xf32>
    %109 = vector.extract_strided_slice %5 {offsets = [5, 0], sizes = [1, 512], strides = [1, 1]} : vector<8x512xf32> to vector<1x512xf32>
    %110 = arith.truncf %108 : vector<1x128xf32> to vector<1x128xbf16>
    %cst_21 = arith.constant dense<0.000000e+00> : vector<1x512xf32>
    %111 = tpu.matmul %110, %6, %cst_21 {dimension_numbers = #tpu.dot_dimension_numbers<[1], [0], [0], [1], [0, 0, 1, 1], [], []>} : vector<1x128xbf16>, vector<128x512xbf16>, vector<1x512xf32> -> vector<1x512xf32>
    %112 = arith.addf %109, %111 : vector<1x512xf32>
    %113 = vector.extract_strided_slice %112 {offsets = [0, 0], sizes = [1, 384], strides = [1, 1]} : vector<1x512xf32> to vector<1x384xf32>
    %114 = arith.negf %113 : vector<1x384xf32>
    %115 = math.exp %114 : vector<1x384xf32>
    %cst_22 = arith.constant 1.000000e+00 : f32
    %116 = vector.broadcast %cst_22 : f32 to vector<1x384xf32>
    %117 = arith.addf %116, %115 : vector<1x384xf32>
    %118 = arith.divf %116, %117 : vector<1x384xf32>
    %119 = vector.extract_strided_slice %118 {offsets = [0, 0], sizes = [1, 128], strides = [1, 1]} : vector<1x384xf32> to vector<1x128xf32>
    %120 = vector.extract_strided_slice %118 {offsets = [0, 128], sizes = [1, 128], strides = [1, 1]} : vector<1x384xf32> to vector<1x128xf32>
    %121 = vector.extract_strided_slice %118 {offsets = [0, 256], sizes = [1, 128], strides = [1, 1]} : vector<1x384xf32> to vector<1x128xf32>
    %122 = vector.extract_strided_slice %112 {offsets = [0, 384], sizes = [1, 128], strides = [1, 1]} : vector<1x512xf32> to vector<1x128xf32>
    %123 = math.tanh %122 : vector<1x128xf32>
    %124 = arith.mulf %120, %106 : vector<1x128xf32>
    %125 = arith.mulf %119, %123 : vector<1x128xf32>
    %126 = arith.addf %124, %125 : vector<1x128xf32>
    %127 = math.tanh %126 : vector<1x128xf32>
    %128 = arith.mulf %121, %127 : vector<1x128xf32>
    %129 = vector.extract_strided_slice %5 {offsets = [6, 0], sizes = [1, 512], strides = [1, 1]} : vector<8x512xf32> to vector<1x512xf32>
    %130 = arith.truncf %128 : vector<1x128xf32> to vector<1x128xbf16>
    %cst_23 = arith.constant dense<0.000000e+00> : vector<1x512xf32>
    %131 = tpu.matmul %130, %6, %cst_23 {dimension_numbers = #tpu.dot_dimension_numbers<[1], [0], [0], [1], [0, 0, 1, 1], [], []>} : vector<1x128xbf16>, vector<128x512xbf16>, vector<1x512xf32> -> vector<1x512xf32>
    %132 = arith.addf %129, %131 : vector<1x512xf32>
    %133 = vector.extract_strided_slice %132 {offsets = [0, 0], sizes = [1, 384], strides = [1, 1]} : vector<1x512xf32> to vector<1x384xf32>
    %134 = arith.negf %133 : vector<1x384xf32>
    %135 = math.exp %134 : vector<1x384xf32>
    %cst_24 = arith.constant 1.000000e+00 : f32
    %136 = vector.broadcast %cst_24 : f32 to vector<1x384xf32>
    %137 = arith.addf %136, %135 : vector<1x384xf32>
    %138 = arith.divf %136, %137 : vector<1x384xf32>
    %139 = vector.extract_strided_slice %138 {offsets = [0, 0], sizes = [1, 128], strides = [1, 1]} : vector<1x384xf32> to vector<1x128xf32>
    %140 = vector.extract_strided_slice %138 {offsets = [0, 128], sizes = [1, 128], strides = [1, 1]} : vector<1x384xf32> to vector<1x128xf32>
    %141 = vector.extract_strided_slice %138 {offsets = [0, 256], sizes = [1, 128], strides = [1, 1]} : vector<1x384xf32> to vector<1x128xf32>
    %142 = vector.extract_strided_slice %132 {offsets = [0, 384], sizes = [1, 128], strides = [1, 1]} : vector<1x512xf32> to vector<1x128xf32>
    %143 = math.tanh %142 : vector<1x128xf32>
    %144 = arith.mulf %140, %126 : vector<1x128xf32>
    %145 = arith.mulf %139, %143 : vector<1x128xf32>
    %146 = arith.addf %144, %145 : vector<1x128xf32>
    %147 = math.tanh %146 : vector<1x128xf32>
    %148 = arith.mulf %141, %147 : vector<1x128xf32>
    %149 = vector.extract_strided_slice %5 {offsets = [7, 0], sizes = [1, 512], strides = [1, 1]} : vector<8x512xf32> to vector<1x512xf32>
    %150 = arith.truncf %148 : vector<1x128xf32> to vector<1x128xbf16>
    %cst_25 = arith.constant dense<0.000000e+00> : vector<1x512xf32>
    %151 = tpu.matmul %150, %6, %cst_25 {dimension_numbers = #tpu.dot_dimension_numbers<[1], [0], [0], [1], [0, 0, 1, 1], [], []>} : vector<1x128xbf16>, vector<128x512xbf16>, vector<1x512xf32> -> vector<1x512xf32>
    %152 = arith.addf %149, %151 : vector<1x512xf32>
    %153 = vector.extract_strided_slice %152 {offsets = [0, 0], sizes = [1, 384], strides = [1, 1]} : vector<1x512xf32> to vector<1x384xf32>
    %154 = arith.negf %153 : vector<1x384xf32>
    %155 = math.exp %154 : vector<1x384xf32>
    %cst_26 = arith.constant 1.000000e+00 : f32
    %156 = vector.broadcast %cst_26 : f32 to vector<1x384xf32>
    %157 = arith.addf %156, %155 : vector<1x384xf32>
    %158 = arith.divf %156, %157 : vector<1x384xf32>
    %159 = vector.extract_strided_slice %158 {offsets = [0, 0], sizes = [1, 128], strides = [1, 1]} : vector<1x384xf32> to vector<1x128xf32>
    %160 = vector.extract_strided_slice %158 {offsets = [0, 128], sizes = [1, 128], strides = [1, 1]} : vector<1x384xf32> to vector<1x128xf32>
    %161 = vector.extract_strided_slice %158 {offsets = [0, 256], sizes = [1, 128], strides = [1, 1]} : vector<1x384xf32> to vector<1x128xf32>
    %162 = vector.extract_strided_slice %152 {offsets = [0, 384], sizes = [1, 128], strides = [1, 1]} : vector<1x512xf32> to vector<1x128xf32>
    %163 = math.tanh %162 : vector<1x128xf32>
    %164 = arith.mulf %160, %146 : vector<1x128xf32>
    %165 = arith.mulf %159, %163 : vector<1x128xf32>
    %166 = arith.addf %164, %165 : vector<1x128xf32>
    %167 = math.tanh %166 : vector<1x128xf32>
    %168 = arith.mulf %161, %167 : vector<1x128xf32>
    %169 = tpu.concatenate %28, %48, %68, %88, %108, %128, %148, %168 in 0 : vector<1x128xf32>, vector<1x128xf32>, vector<1x128xf32>, vector<1x128xf32>, vector<1x128xf32>, vector<1x128xf32>, vector<1x128xf32>, vector<1x128xf32> -> vector<8x128xf32>
    %170 = arith.truncf %169 : vector<8x128xf32> to vector<8x128xbf16>
    %c0_27 = arith.constant 0 : index
    %c0_28 = arith.constant 0 : index
    %171 = vector.load %arg6[%c0_27, %c0_28] : memref<128x128xbf16, #tpu.memory_space<vmem>>, vector<128x128xbf16>
    %cst_29 = arith.constant dense<0.000000e+00> : vector<8x128xf32>
    %172 = tpu.matmul %170, %171, %cst_29 {dimension_numbers = #tpu.dot_dimension_numbers<[1], [0], [0], [1], [0, 0, 1, 1], [], []>} : vector<8x128xbf16>, vector<128x128xbf16>, vector<8x128xf32> -> vector<8x128xf32>
    %c0_30 = arith.constant 0 : index
    %c0_31 = arith.constant 0 : index
    %173 = vector.load %arg7[%c0_30, %c0_31] : memref<1x128xf32, #tpu.memory_space<vmem>>, vector<1x128xf32>
    %174 = vector.broadcast %173 : vector<1x128xf32> to vector<8x128xf32>
    %175 = arith.addf %172, %174 : vector<8x128xf32>
    %c0_32 = arith.constant 0 : index
    %c0_33 = arith.constant 0 : index
    %176 = vector.load %arg8[%c0_32, %c0_33] : memref<8x128xf32, #tpu.memory_space<vmem>>, vector<8x128xf32>
    tpu.vector_store %arg8[%c0_32, %c0_33], %175 {strides = array<i32>} : memref<8x128xf32, #tpu.memory_space<vmem>>, vector<8x128xf32>,
    %c0_34 = arith.constant 0 : index
    %c0_35 = arith.constant 0 : index
    %177 = vector.load %arg9[%c0_34, %c0_35] : memref<1x128xf32, #tpu.memory_space<vmem>>, vector<1x128xf32>
    tpu.vector_store %arg9[%c0_34, %c0_35], %168 {strides = array<i32>} : memref<1x128xf32, #tpu.memory_space<vmem>>, vector<1x128xf32>,
    %c0_36 = arith.constant 0 : index
    %c0_37 = arith.constant 0 : index
    %178 = vector.load %arg10[%c0_36, %c0_37] : memref<1x128xf32, #tpu.memory_space<vmem>>, vector<1x128xf32>
    tpu.vector_store %arg10[%c0_36, %c0_37], %166 {strides = array<i32>} : memref<1x128xf32, #tpu.memory_space<vmem>>, vector<1x128xf32>,
    return
  }
}

</mosaic_0001>

<llo_original>
// kernel: tpu_custom_call.1
$region0: #{tpu_custom_call.1}
  #allocation0 [shape = 'u32[]', space=smem, size = 0x4, offset = 0x4, fixed_abs, tag = 'smem constant byte address 0x4 - core index']
  #allocation1 [shape = 'u32[144,128]{1,0:T(1,128)}', space=vmem, size = 0x12000, scoped, tag = 'internal scratch']
  %s0 = inlined_call_operand.hbm [shape: bf16[8,32], index: 0, kind: input, shape index: {}]
  %s1 = inlined_call_operand.vmem [shape: f32[1,128], index: 1, kind: input, shape index: {}]
  %s2 = inlined_call_operand.vmem [shape: f32[1,128], index: 2, kind: input, shape index: {}]
  %s3 = inlined_call_operand.hbm [shape: bf16[32,512], index: 3, kind: input, shape index: {}]
  %s4 = inlined_call_operand.hbm [shape: bf16[128,512], index: 4, kind: input, shape index: {}]
  %s5 = inlined_call_operand.vmem [shape: f32[1,512], index: 5, kind: input, shape index: {}]
  %s6 = inlined_call_operand.hbm [shape: bf16[128,128], index: 6, kind: input, shape index: {}]
  %s7 = inlined_call_operand.vmem [shape: f32[1,128], index: 7, kind: input, shape index: {}]
  %s8 = inlined_call_operand.hbm [shape: f32[8,128], index: 8, kind: output, shape index: {0}]
  %s9 = inlined_call_operand.hbm [shape: f32[1,128], index: 9, kind: output, shape index: {1}]
  %s10 = inlined_call_operand.hbm [shape: f32[1,128], index: 10, kind: output, shape index: {2}]
  %11 = xla_tuple %s8, %s9, %s10
  %s12 = sld [smem:[#allocation0]]
  $region74: #{tpu_custom_call.1} parent=0
    _
  %s14 = ssub.s32 1, %s12
  %s15 = scalar_select 0, %s14, %s12
  $region1: #{tpu_custom_call.1} parent=0
    #allocation2 [shape = 'u8[2048]{0}', space=vmem, size = 0x800, scoped, tag = 'input window, operand 0, single buffered']
    #allocation3 [shape = 's32[1]{0}', space=sflag, size = 0x4, scoped, tag = 'scoped memory for tpu_custom_call.1']
    #allocation4 [shape = 's32[1]{0}', space=sflag, size = 0x4, scoped, tag = 'scoped memory for tpu_custom_call.1']
    #allocation5 [shape = 'u8[32768]{0}', space=vmem, size = 0x8000, scoped, tag = 'input window, operand 3, single buffered']
    #allocation6 [shape = 's32[1]{0}', space=sflag, size = 0x4, scoped, tag = 'scoped memory for tpu_custom_call.1']
    #allocation7 [shape = 'u8[131072]{0}', space=vmem, size = 0x20000, scoped, tag = 'input window, operand 4, single buffered']
    #allocation8 [shape = 'u8[32768]{0}', space=vmem, size = 0x8000, scoped, tag = 'input window, operand 6, single buffered']
    #allocation9 [shape = 's32[1]{0}', space=sflag, size = 0x4, scoped, tag = 'scoped memory for tpu_custom_call.1']
    #allocation10 [shape = 'u8[4096]{0}', space=vmem, size = 0x1000, scoped, tag = 'output window, operand 0, single buffered']
    #allocation11 [shape = 'u8[512]{0}', space=vmem, size = 0x400, scoped, tag = 'output window, operand 1, single buffered']
    #allocation12 [shape = 's32[1]{0}', space=sflag, size = 0x4, scoped, tag = 'scoped memory for tpu_custom_call.1']
    #allocation13 [shape = 'u8[512]{0}', space=vmem, size = 0x400, scoped, tag = 'output window, operand 2, single buffered']
    %16 = vsyncpa [#allocation3], 0
    %17 = vsyncpa [#allocation6], 0
    %18 = vsyncpa [#allocation9], 0
    %19 = vsyncpa [#allocation4], 0
    %20 = vsyncpa [#allocation12], 0
    // Predicated region
    $region2: #{tpu_custom_call.1} parent=1 // pred_check
      _
    $region3: #{tpu_custom_call.1} parent=1 // pred_check_branch
      %22 = sbr.rel (0) target = $region5
    $region4: #{tpu_custom_call.1} parent=1 // pred_region
      %s24 = ssub.s32 64, 64
      %25 = vsyncadd [#allocation3], %s24
      %s27 = sshll.u32 [#allocation2], 4
      %s28 = int_to_ptr.vmem [resolvable:$true] %s27
      %30 = dma.hbm_to_vmem [thread:$0]  %s0, 64, %s28, [#allocation3]
    $region5: #{tpu_custom_call.1} parent=1 // pred_fallthru
      _
    // Predicated region
    $region6: #{tpu_custom_call.1} parent=1 // pred_check
      _
    $region7: #{tpu_custom_call.1} parent=1 // pred_check_branch
      %32 = sbr.rel (0) target = $region9
    $region8: #{tpu_custom_call.1} parent=1 // pred_region
      _
    $region9: #{tpu_custom_call.1} parent=1 // pred_fallthru
      _
    // Predicated region
    $region10: #{tpu_custom_call.1} parent=1 // pred_check
      _
    $region11: #{tpu_custom_call.1} parent=1 // pred_check_branch
      %34 = sbr.rel (0) target = $region13
    $region12: #{tpu_custom_call.1} parent=1 // pred_region
      _
    $region13: #{tpu_custom_call.1} parent=1 // pred_fallthru
      _
    // Predicated region
    $region14: #{tpu_custom_call.1} parent=1 // pred_check
      _
    $region15: #{tpu_custom_call.1} parent=1 // pred_check_branch
      %36 = sbr.rel (0) target = $region17
    $region16: #{tpu_custom_call.1} parent=1 // pred_region
      %s38 = ssub.s32 1024, 1024
      %39 = vsyncadd [#allocation6], %s38
      %s40 = sshll.u32 [#allocation5], 4
      %s41 = int_to_ptr.vmem [resolvable:$true] %s40
      %46 = dma.hbm_to_vmem [thread:$0]  %s3, 1024, %s41, [#allocation6], 256, 256, 16
    $region17: #{tpu_custom_call.1} parent=1 // pred_fallthru
      _
    // Predicated region
    $region18: #{tpu_custom_call.1} parent=1 // pred_check
      _
    $region19: #{tpu_custom_call.1} parent=1 // pred_check_branch
      %48 = sbr.rel (0) target = $region21
    $region20: #{tpu_custom_call.1} parent=1 // pred_region
      %s50 = ssub.s32 4096, 4096
      %51 = vsyncadd [#allocation6], %s50
      %s52 = sshll.u32 [#allocation7], 4
      %s53 = int_to_ptr.vmem [resolvable:$true] %s52
      %58 = dma.hbm_to_vmem [thread:$0]  %s4, 4096, %s53, [#allocation6], 256, 256, 16
    $region21: #{tpu_custom_call.1} parent=1 // pred_fallthru
      _
    // Predicated region
    $region22: #{tpu_custom_call.1} parent=1 // pred_check
      _
    $region23: #{tpu_custom_call.1} parent=1 // pred_check_branch
      %60 = sbr.rel (0) target = $region25
    $region24: #{tpu_custom_call.1} parent=1 // pred_region
      _
    $region25: #{tpu_custom_call.1} parent=1 // pred_fallthru
      _
    // Predicated region
    $region26: #{tpu_custom_call.1} parent=1 // pred_check
      _
    $region27: #{tpu_custom_call.1} parent=1 // pred_check_branch
      %62 = sbr.rel (0) target = $region29
    $region28: #{tpu_custom_call.1} parent=1 // pred_region
      %s64 = ssub.s32 1024, 1024
      %65 = vsyncadd [#allocation9], %s64
      %s66 = sshll.u32 [#allocation8], 4
      %s67 = int_to_ptr.vmem [resolvable:$true] %s66
      %72 = dma.hbm_to_vmem [thread:$0]  %s6, 1024, %s67, [#allocation9], 64, 64, 4
    $region29: #{tpu_custom_call.1} parent=1 // pred_fallthru
      _
    // Predicated region
    $region30: #{tpu_custom_call.1} parent=1 // pred_check
      _
    $region31: #{tpu_custom_call.1} parent=1 // pred_check_branch
      %74 = sbr.rel (0) target = $region33
    $region32: #{tpu_custom_call.1} parent=1 // pred_region
      _
    $region33: #{tpu_custom_call.1} parent=1 // pred_fallthru
      _
    // Predicated region
    $region34: #{tpu_custom_call.1} parent=1 // pred_check
      _
    $region35: #{tpu_custom_call.1} parent=1 // pred_check_branch
      %76 = sbr.rel (0) target = $region37
    $region36: #{tpu_custom_call.1} parent=1 // pred_region
      %77 = dma.done [#allocation3], 64
    $region37: #{tpu_custom_call.1} parent=1 // pred_fallthru
      _
    // Predicated region
    $region38: #{tpu_custom_call.1} parent=1 // pred_check
      _
    $region39: #{tpu_custom_call.1} parent=1 // pred_check_branch
      %79 = sbr.rel (0) target = $region41
    $region40: #{tpu_custom_call.1} parent=1 // pred_region
      %80 = dma.done [#allocation6], 1024
    $region41: #{tpu_custom_call.1} parent=1 // pred_fallthru
      _
    // Predicated region
    $region42: #{tpu_custom_call.1} parent=1 // pred_check
      _
    $region43: #{tpu_custom_call.1} parent=1 // pred_check_branch
      %82 = sbr.rel (0) target = $region45
    $region44: #{tpu_custom_call.1} parent=1 // pred_region
      %83 = dma.done [#allocation6], 4096
    $region45: #{tpu_custom_call.1} parent=1 // pred_fallthru
      _
    // Predicated region
    $region46: #{tpu_custom_call.1} parent=1 // pred_check
      _
    $region47: #{tpu_custom_call.1} parent=1 // pred_check_branch
      %85 = sbr.rel (0) target = $region49
    $region48: #{tpu_custom_call.1} parent=1 // pred_region
      %86 = dma.done [#allocation9], 1024
    $region49: #{tpu_custom_call.1} parent=1 // pred_fallthru
      _
    %v88 = vld [vmem:[#allocation2] sm:$0xf]
    %v89 = vld [vmem:[#allocation5] sm:$0xff]
    %v90 = vld [vmem:[#allocation5 + $0x8] sm:$0xff]
    %v91 = vld [vmem:[#allocation5 + $0x10] sm:$0xff]
    %v92 = vld [vmem:[#allocation5 + $0x18] sm:$0xff]
    %v93 = vld [vmem:[#allocation5 + $0x20] sm:$0xff]
    %v94 = vld [vmem:[#allocation5 + $0x28] sm:$0xff]
    %v95 = vld [vmem:[#allocation5 + $0x30] sm:$0xff]
    %v96 = vld [vmem:[#allocation5 + $0x38] sm:$0xff]
    %v97 = vld [vmem:[%s5] sm:$0xf]
    %v99 = vlaneseq
    %v100 = vshrl.u32 %v99, 7
    %v101 = vsub.s32 0, %v100
    %v102 = vrot.slane %v97, %v101
    %v103 = vlaneseq
    %v104 = vshrl.u32 %v103, 7
    %v105 = vsub.s32 1, %v104
    %v106 = vrot.slane %v97, %v105
    %v107 = vlaneseq
    %v108 = vshrl.u32 %v107, 7
    %v109 = vsub.s32 2, %v108
    %v110 = vrot.slane %v97, %v109
    %v111 = vlaneseq
    %v112 = vshrl.u32 %v111, 7
    %v113 = vsub.s32 3, %v112
    %v114 = vrot.slane %v97, %v113
    %v127 = vunpack.c.l.b16 %v89
    %v128 = vunpack.c.h.b16 %v89
    %v129 = vunpack.c.l.b16 %v90
    %v130 = vunpack.c.h.b16 %v90
    %v131 = vunpack.c.l.b16 %v91
    %v132 = vunpack.c.h.b16 %v91
    %v133 = vunpack.c.l.b16 %v92
    %v134 = vunpack.c.h.b16 %v92
    %v135 = vunpack.c.l.b16 %v93
    %v136 = vunpack.c.h.b16 %v93
    %v137 = vunpack.c.l.b16 %v94
    %v138 = vunpack.c.h.b16 %v94
    %v139 = vunpack.c.l.b16 %v95
    %v140 = vunpack.c.h.b16 %v95
    %v141 = vunpack.c.l.b16 %v96
    %v142 = vunpack.c.h.b16 %v96
    %v143 = vpack.c.b16 %v131, %v127
    %v144 = vpack.c.b16 %v132, %v128
    %v145 = vpack.c.b16 %v133, %v129
    %v146 = vpack.c.b16 %v134, %v130
    %v147 = vpack.c.b16 %v139, %v135
    %v148 = vpack.c.b16 %v140, %v136
    %v149 = vpack.c.b16 %v141, %v137
    %v150 = vpack.c.b16 %v142, %v138
    %vm159 = vcmask 261120
    %v161 = vsel %vm159, %v88, 0
    %163 = vmatprep.subr.bf16.mxu0 %v144
    %164 = vmatpush1.bf16.msra.mxu0 %v143
    %165 = vmatprep.subr.bf16.mxu0 %v148
    %166 = vmatpush1.bf16.msra.mxu0 %v147
    %167 = vmatprep.subr.bf16.mxu0 0
    %168 = vmatpush1.bf16.msra.mxu0 0
    %169 = vmatprep.subr.bf16.mxu0 0
    %170 = vmatpush1.bf16.msra.mxu0 0
    %171 = vmatprep.subr.bf16.mxu0 0
    %172 = vmatpush1.bf16.msra.mxu0 0
    %173 = vmatprep.subr.bf16.mxu0 0
    %174 = vmatpush1.bf16.msra.mxu0 0
    %175 = vmatprep.subr.bf16.mxu0 0
    %176 = vmatpush1.bf16.msra.mxu0 0
    %177 = vmatprep.subr.bf16.mxu0 0
    %178 = vmatpush1.bf16.msra.mxu0 0
    %179 = vmatprep.subr.bf16.mxu0 0
    %180 = vmatpush1.bf16.msra.mxu0 0
    %181 = vmatprep.subr.bf16.mxu0 0
    %182 = vmatpush1.bf16.msra.mxu0 0
    %183 = vmatprep.subr.bf16.mxu0 0
    %184 = vmatpush1.bf16.msra.mxu0 0
    %185 = vmatprep.subr.bf16.mxu0 0
    %186 = vmatpush1.bf16.msra.mxu0 0
    %187 = vmatprep.subr.bf16.mxu0 0
    %188 = vmatpush1.bf16.msra.mxu0 0
    %189 = vmatprep.subr.bf16.mxu0 0
    %190 = vmatpush1.bf16.msra.mxu0 0
    %191 = vmatprep.subr.bf16.mxu0 0
    %192 = vmatpush1.bf16.msra.mxu0 0
    %193 = vmatprep.subr.bf16.mxu0 0
    %194 = vmatpush1.bf16.msra.mxu0 0
    %195 = vmatprep.mubr.bf16.mxu0 0
    %196 = vmatmul.mubr.bf16.gmra.mrb[0].mxu0 %v161
    %v197 = vpop.f32.mrb[0].mxu0
    %v198 = vadd.f32 %v102, %v197
    %v199 = vpop.f32.mrb[0].mxu0
    %v200 = vadd.f32 %v106, %v199
    %v201 = vpop.f32.mrb[0].mxu0
    %v202 = vpop.f32.mrb[0].mxu0
    %203 = vdwg.mxu0
    %204 = vmatprep.subr.bf16.mxu0 %v146
    %205 = vmatpush1.bf16.msra.mxu0 %v145
    %206 = vmatprep.subr.bf16.mxu0 %v150
    %207 = vmatpush1.bf16.msra.mxu0 %v149
    %208 = vmatprep.subr.bf16.mxu0 0
    %209 = vmatpush1.bf16.msra.mxu0 0
    %210 = vmatprep.subr.bf16.mxu0 0
    %211 = vmatpush1.bf16.msra.mxu0 0
    %212 = vmatprep.subr.bf16.mxu0 0
    %213 = vmatpush1.bf16.msra.mxu0 0
    %214 = vmatprep.subr.bf16.mxu0 0
    %215 = vmatpush1.bf16.msra.mxu0 0
    %216 = vmatprep.subr.bf16.mxu0 0
    %217 = vmatpush1.bf16.msra.mxu0 0
    %218 = vmatprep.subr.bf16.mxu0 0
    %219 = vmatpush1.bf16.msra.mxu0 0
    %220 = vmatprep.subr.bf16.mxu0 0
    %221 = vmatpush1.bf16.msra.mxu0 0
    %222 = vmatprep.subr.bf16.mxu0 0
    %223 = vmatpush1.bf16.msra.mxu0 0
    %224 = vmatprep.subr.bf16.mxu0 0
    %225 = vmatpush1.bf16.msra.mxu0 0
    %226 = vmatprep.subr.bf16.mxu0 0
    %227 = vmatpush1.bf16.msra.mxu0 0
    %228 = vmatprep.subr.bf16.mxu0 0
    %229 = vmatpush1.bf16.msra.mxu0 0
    %230 = vmatprep.subr.bf16.mxu0 0
    %231 = vmatpush1.bf16.msra.mxu0 0
    %232 = vmatprep.subr.bf16.mxu0 0
    %233 = vmatpush1.bf16.msra.mxu0 0
    %234 = vmatprep.subr.bf16.mxu0 0
    %235 = vmatpush1.bf16.msra.mxu0 0
    %236 = vmatprep.mubr.bf16.mxu0 0
    %237 = vmatmul.mubr.bf16.gmra.mrb[0].mxu0 %v161
    %v238 = vpop.f32.mrb[0].mxu0
    %v239 = vadd.f32 %v110, %v238
    %v240 = vpop.f32.mrb[0].mxu0
    %v241 = vadd.f32 %v114, %v240
    %v242 = vpop.f32.mrb[0].mxu0
    %v243 = vpop.f32.mrb[0].mxu0
    %244 = vdwg.mxu0
    %v245 = vld [vmem:[#allocation7] sm:$0xff]
    %v246 = vld [vmem:[#allocation7 + $0x8] sm:$0xff]
    %v247 = vld [vmem:[#allocation7 + $0x10] sm:$0xff]
    %v248 = vld [vmem:[#allocation7 + $0x18] sm:$0xff]
    %v249 = vld [vmem:[#allocation7 + $0x20] sm:$0xff]
    %v250 = vld [vmem:[#allocation7 + $0x28] sm:$0xff]
    %v251 = vld [vmem:[#allocation7 + $0x30] sm:$0xff]
    %v252 = vld [vmem:[#allocation7 + $0x38] sm:$0xff]
    %v253 = vld [vmem:[#allocation7 + $0x40] sm:$0xff]
    %v254 = vld [vmem:[#allocation7 + $0x48] sm:$0xff]
    %v255 = vld [vmem:[#allocation7 + $0x50] sm:$0xff]
    %v256 = vld [vmem:[#allocation7 + $0x58] sm:$0xff]
    %v257 = vld [vmem:[#allocation7 + $0x60] sm:$0xff]
    %v258 = vld [vmem:[#allocation7 + $0x68] sm:$0xff]
    %v259 = vld [vmem:[#allocation7 + $0x70] sm:$0xff]
    %v260 = vld [vmem:[#allocation7 + $0x78] sm:$0xff]
    %v261 = vld [vmem:[#allocation7 + $0x80] sm:$0xff]
    %v262 = vld [vmem:[#allocation7 + $0x88] sm:$0xff]
    %v263 = vld [vmem:[#allocation7 + $0x90] sm:$0xff]
    %v264 = vld [vmem:[#allocation7 + $0x98] sm:$0xff]
    %v265 = vld [vmem:[#allocation7 + $0xa0] sm:$0xff]
    %v266 = vld [vmem:[#allocation7 + $0xa8] sm:$0xff]
    %v267 = vld [vmem:[#allocation7 + $0xb0] sm:$0xff]
    %v268 = vld [vmem:[#allocation7 + $0xb8] sm:$0xff]
    %v269 = vld [vmem:[#allocation7 + $0xc0] sm:$0xff]
    %v270 = vld [vmem:[#allocation7 + $0xc8] sm:$0xff]
    %v271 = vld [vmem:[#allocation7 + $0xd0] sm:$0xff]
    %v272 = vld [vmem:[#allocation7 + $0xd8] sm:$0xff]
    %v273 = vld [vmem:[#allocation7 + $0xe0] sm:$0xff]
    %v274 = vld [vmem:[#allocation7 + $0xe8] sm:$0xff]
    %v275 = vld [vmem:[#allocation7 + $0xf0] sm:$0xff]
    %v276 = vld [vmem:[#allocation7 + $0xf8] sm:$0xff]
    %v277 = vld [vmem:[%s1] sm:$0x1]
    %v278 = vld [vmem:[%s2] sm:$0x1]
    %v279 = vpack.c.bf16 %v277, %v277
    %v312 = vunpack.c.l.b16 %v245
    %v313 = vunpack.c.h.b16 %v245
    %v314 = vunpack.c.l.b16 %v246
    %v315 = vunpack.c.h.b16 %v246
    %v316 = vunpack.c.l.b16 %v247
    %v317 = vunpack.c.h.b16 %v247
    %v318 = vunpack.c.l.b16 %v248
    %v319 = vunpack.c.h.b16 %v248
    %v320 = vunpack.c.l.b16 %v249
    %v321 = vunpack.c.h.b16 %v249
    %v322 = vunpack.c.l.b16 %v250
    %v323 = vunpack.c.h.b16 %v250
    %v324 = vunpack.c.l.b16 %v251
    %v325 = vunpack.c.h.b16 %v251
    %v326 = vunpack.c.l.b16 %v252
    %v327 = vunpack.c.h.b16 %v252
    %v328 = vunpack.c.l.b16 %v253
    %v329 = vunpack.c.h.b16 %v253
    %v330 = vunpack.c.l.b16 %v254
    %v331 = vunpack.c.h.b16 %v254
    %v332 = vunpack.c.l.b16 %v255
    %v333 = vunpack.c.h.b16 %v255
    %v334 = vunpack.c.l.b16 %v256
    %v335 = vunpack.c.h.b16 %v256
    %v336 = vunpack.c.l.b16 %v257
    %v337 = vunpack.c.h.b16 %v257
    %v338 = vunpack.c.l.b16 %v258
    %v339 = vunpack.c.h.b16 %v258
    %v340 = vunpack.c.l.b16 %v259
    %v341 = vunpack.c.h.b16 %v259
    %v342 = vunpack.c.l.b16 %v260
    %v343 = vunpack.c.h.b16 %v260
    %v344 = vunpack.c.l.b16 %v261
    %v345 = vunpack.c.h.b16 %v261
    %v346 = vunpack.c.l.b16 %v262
    %v347 = vunpack.c.h.b16 %v262
    %v348 = vunpack.c.l.b16 %v263
    %v349 = vunpack.c.h.b16 %v263
    %v350 = vunpack.c.l.b16 %v264
    %v351 = vunpack.c.h.b16 %v264
    %v352 = vunpack.c.l.b16 %v265
    %v353 = vunpack.c.h.b16 %v265
    %v354 = vunpack.c.l.b16 %v266
    %v355 = vunpack.c.h.b16 %v266
    %v356 = vunpack.c.l.b16 %v267
    %v357 = vunpack.c.h.b16 %v267
    %v358 = vunpack.c.l.b16 %v268
    %v359 = vunpack.c.h.b16 %v268
    %v360 = vunpack.c.l.b16 %v269
    %v361 = vunpack.c.h.b16 %v269
    %v362 = vunpack.c.l.b16 %v270
    %v363 = vunpack.c.h.b16 %v270
    %v364 = vunpack.c.l.b16 %v271
    %v365 = vunpack.c.h.b16 %v271
    %v366 = vunpack.c.l.b16 %v272
    %v367 = vunpack.c.h.b16 %v272
    %v368 = vunpack.c.l.b16 %v273
    %v369 = vunpack.c.h.b16 %v273
    %v370 = vunpack.c.l.b16 %v274
    %v371 = vunpack.c.h.b16 %v274
    %v372 = vunpack.c.l.b16 %v275
    %v373 = vunpack.c.h.b16 %v275
    %v374 = vunpack.c.l.b16 %v276
    %v375 = vunpack.c.h.b16 %v276
    %v376 = vpack.c.b16 %v316, %v312
    %v377 = vpack.c.b16 %v317, %v313
    %v378 = vpack.c.b16 %v318, %v314
    %v379 = vpack.c.b16 %v319, %v315
    %v380 = vpack.c.b16 %v324, %v320
    %v381 = vpack.c.b16 %v325, %v321
    %v382 = vpack.c.b16 %v326, %v322
    %v383 = vpack.c.b16 %v327, %v323
    %v384 = vpack.c.b16 %v332, %v328
    %v385 = vpack.c.b16 %v333, %v329
    %v386 = vpack.c.b16 %v334, %v330
    %v387 = vpack.c.b16 %v335, %v331
    %v388 = vpack.c.b16 %v340, %v336
    %v389 = vpack.c.b16 %v341, %v337
    %v390 = vpack.c.b16 %v342, %v338
    %v391 = vpack.c.b16 %v343, %v339
    %v392 = vpack.c.b16 %v348, %v344
    %v393 = vpack.c.b16 %v349, %v345
    %v394 = vpack.c.b16 %v350, %v346
    %v395 = vpack.c.b16 %v351, %v347
    %v396 = vpack.c.b16 %v356, %v352
    %v397 = vpack.c.b16 %v357, %v353
    %v398 = vpack.c.b16 %v358, %v354
    %v399 = vpack.c.b16 %v359, %v355
    %v400 = vpack.c.b16 %v364, %v360
    %v401 = vpack.c.b16 %v365, %v361
    %v402 = vpack.c.b16 %v366, %v362
    %v403 = vpack.c.b16 %v367, %v363
    %v404 = vpack.c.b16 %v372, %v368
    %v405 = vpack.c.b16 %v373, %v369
    %v406 = vpack.c.b16 %v374, %v370
    %v407 = vpack.c.b16 %v375, %v371
    %440 = vmatprep.subr.bf16.mxu0 %v377
    %441 = vmatpush1.bf16.msra.mxu0 %v376
    %442 = vmatprep.subr.bf16.mxu0 %v381
    %443 = vmatpush1.bf16.msra.mxu0 %v380
    %444 = vmatprep.subr.bf16.mxu0 %v385
    %445 = vmatpush1.bf16.msra.mxu0 %v384
    %446 = vmatprep.subr.bf16.mxu0 %v389
    %447 = vmatpush1.bf16.msra.mxu0 %v388
    %448 = vmatprep.subr.bf16.mxu0 %v393
    %449 = vmatpush1.bf16.msra.mxu0 %v392
    %450 = vmatprep.subr.bf16.mxu0 %v397
    %451 = vmatpush1.bf16.msra.mxu0 %v396
    %452 = vmatprep.subr.bf16.mxu0 %v401
    %453 = vmatpush1.bf16.msra.mxu0 %v400
    %454 = vmatprep.subr.bf16.mxu0 %v405
    %455 = vmatpush1.bf16.msra.mxu0 %v404
    %456 = vmatprep.subr.bf16.mxu0 0
    %457 = vmatpush1.bf16.msra.mxu0 0
    %458 = vmatprep.subr.bf16.mxu0 0
    %459 = vmatpush1.bf16.msra.mxu0 0
    %460 = vmatprep.subr.bf16.mxu0 0
    %461 = vmatpush1.bf16.msra.mxu0 0
    %462 = vmatprep.subr.bf16.mxu0 0
    %463 = vmatpush1.bf16.msra.mxu0 0
    %464 = vmatprep.subr.bf16.mxu0 0
    %465 = vmatpush1.bf16.msra.mxu0 0
    %466 = vmatprep.subr.bf16.mxu0 0
    %467 = vmatpush1.bf16.msra.mxu0 0
    %468 = vmatprep.subr.bf16.mxu0 0
    %469 = vmatpush1.bf16.msra.mxu0 0
    %470 = vmatprep.subr.bf16.mxu0 0
    %471 = vmatpush1.bf16.msra.mxu0 0
    %472 = vmatprep.mubr.bf16.mxu0 0
    %473 = vmatmul.mubr.bf16.gmra.mrb[0].mxu0 %v279
    %v474 = vpop.f32.mrb[0].mxu0
    %v475 = vadd.f32 0.0, %v474
    %v476 = vpop.f32.mrb[0].mxu0
    %v477 = vadd.f32 0.0, %v476
    %v478 = vpop.f32.mrb[0].mxu0
    %v479 = vpop.f32.mrb[0].mxu0
    %480 = vdwg.mxu0
    %481 = vmatprep.subr.bf16.mxu0 %v379
    %482 = vmatpush1.bf16.msra.mxu0 %v378
    %483 = vmatprep.subr.bf16.mxu0 %v383
    %484 = vmatpush1.bf16.msra.mxu0 %v382
    %485 = vmatprep.subr.bf16.mxu0 %v387
    %486 = vmatpush1.bf16.msra.mxu0 %v386
    %487 = vmatprep.subr.bf16.mxu0 %v391
    %488 = vmatpush1.bf16.msra.mxu0 %v390
    %489 = vmatprep.subr.bf16.mxu0 %v395
    %490 = vmatpush1.bf16.msra.mxu0 %v394
    %491 = vmatprep.subr.bf16.mxu0 %v399
    %492 = vmatpush1.bf16.msra.mxu0 %v398
    %493 = vmatprep.subr.bf16.mxu0 %v403
    %494 = vmatpush1.bf16.msra.mxu0 %v402
    %495 = vmatprep.subr.bf16.mxu0 %v407
    %496 = vmatpush1.bf16.msra.mxu0 %v406
    %497 = vmatprep.subr.bf16.mxu0 0
    %498 = vmatpush1.bf16.msra.mxu0 0
    %499 = vmatprep.subr.bf16.mxu0 0
    %500 = vmatpush1.bf16.msra.mxu0 0
    %501 = vmatprep.subr.bf16.mxu0 0
    %502 = vmatpush1.bf16.msra.mxu0 0
    %503 = vmatprep.subr.bf16.mxu0 0
    %504 = vmatpush1.bf16.msra.mxu0 0
    %505 = vmatprep.subr.bf16.mxu0 0
    %506 = vmatpush1.bf16.msra.mxu0 0
    %507 = vmatprep.subr.bf16.mxu0 0
    %508 = vmatpush1.bf16.msra.mxu0 0
    %509 = vmatprep.subr.bf16.mxu0 0
    %510 = vmatpush1.bf16.msra.mxu0 0
    %511 = vmatprep.subr.bf16.mxu0 0
    %512 = vmatpush1.bf16.msra.mxu0 0
    %513 = vmatprep.mubr.bf16.mxu0 0
    %514 = vmatmul.mubr.bf16.gmra.mrb[0].mxu0 %v279
    %v515 = vpop.f32.mrb[0].mxu0
    %v516 = vadd.f32 0.0, %v515
    %v517 = vpop.f32.mrb[0].mxu0
    %v518 = vadd.f32 0.0, %v517
    %v519 = vpop.f32.mrb[0].mxu0
    %v520 = vpop.f32.mrb[0].mxu0
    %521 = vdwg.mxu0
    %v522 = vadd.f32 %v198, %v475
    %v523 = vadd.f32 %v200, %v477
    %v524 = vadd.f32 %v239, %v516
    %v525 = vadd.f32 %v241, %v518
    %v526 = vxor.u32 %v522, 2147483648
    %v527 = vxor.u32 %v523, 2147483648
    %v528 = vxor.u32 %v524, 2147483648
    %v529 = vmul.f32 %v526, 1.442695
    %v530 = vpow.pop %v529
    %v531 = vmul.f32 %v527, 1.442695
    %v532 = vpow.pop %v531
    %v533 = vmul.f32 %v528, 1.442695
    %v534 = vpow.pop %v533
    %v535 = vadd.f32 %v530, 1.0
    %v536 = vadd.f32 %v532, 1.0
    %v537 = vadd.f32 %v534, 1.0
    %v538 = vrcp.pop %v535
    %v539 = vmul.f32 1.0, %v538
    %v540 = vrcp.pop %v536
    %v541 = vmul.f32 1.0, %v540
    %v542 = vrcp.pop %v537
    %v543 = vmul.f32 1.0, %v542
    %v544 = vtanh.pop %v525
    %v545 = vmul.f32 %v541, %v278
    %v546 = vmul.f32 %v539, %v544
    %v547 = vadd.f32 %v545, %v546
    %v548 = vtanh.pop %v547
    %v549 = vmul.f32 %v543, %v548
    %v550 = vpack.c.bf16 %v549, %v549
    %551 = vmatprep.subr.bf16.mxu0 %v377
    %552 = vmatpush1.bf16.msra.mxu0 %v376
    %553 = vmatprep.subr.bf16.mxu0 %v381
    %554 = vmatpush1.bf16.msra.mxu0 %v380
    %555 = vmatprep.subr.bf16.mxu0 %v385
    %556 = vmatpush1.bf16.msra.mxu0 %v384
    %557 = vmatprep.subr.bf16.mxu0 %v389
    %558 = vmatpush1.bf16.msra.mxu0 %v388
    %559 = vmatprep.subr.bf16.mxu0 %v393
    %560 = vmatpush1.bf16.msra.mxu0 %v392
    %561 = vmatprep.subr.bf16.mxu0 %v397
    %562 = vmatpush1.bf16.msra.mxu0 %v396
    %563 = vmatprep.subr.bf16.mxu0 %v401
    %564 = vmatpush1.bf16.msra.mxu0 %v400
    %565 = vmatprep.subr.bf16.mxu0 %v405
    %566 = vmatpush1.bf16.msra.mxu0 %v404
    %567 = vmatprep.subr.bf16.mxu0 0
    %568 = vmatpush1.bf16.msra.mxu0 0
    %569 = vmatprep.subr.bf16.mxu0 0
    %570 = vmatpush1.bf16.msra.mxu0 0
    %571 = vmatprep.subr.bf16.mxu0 0
    %572 = vmatpush1.bf16.msra.mxu0 0
    %573 = vmatprep.subr.bf16.mxu0 0
    %574 = vmatpush1.bf16.msra.mxu0 0
    %575 = vmatprep.subr.bf16.mxu0 0
    %576 = vmatpush1.bf16.msra.mxu0 0
    %577 = vmatprep.subr.bf16.mxu0 0
    %578 = vmatpush1.bf16.msra.mxu0 0
    %579 = vmatprep.subr.bf16.mxu0 0
    %580 = vmatpush1.bf16.msra.mxu0 0
    %581 = vmatprep.subr.bf16.mxu0 0
    %582 = vmatpush1.bf16.msra.mxu0 0
    %583 = vmatprep.mubr.bf16.mxu0 0
    %584 = vmatmul.mubr.bf16.gmra.mrb[0].mxu0 %v550
    %v585 = vpop.f32.mrb[0].mxu0
    %v586 = vadd.f32 0.0, %v585
    %v587 = vpop.f32.mrb[0].mxu0
    %v588 = vadd.f32 0.0, %v587
    %v589 = vpop.f32.mrb[0].mxu0
    %v590 = vpop.f32.mrb[0].mxu0
    %591 = vdwg.mxu0
    %592 = vmatprep.subr.bf16.mxu0 %v379
    %593 = vmatpush1.bf16.msra.mxu0 %v378
    %594 = vmatprep.subr.bf16.mxu0 %v383
    %595 = vmatpush1.bf16.msra.mxu0 %v382
    %596 = vmatprep.subr.bf16.mxu0 %v387
    %597 = vmatpush1.bf16.msra.mxu0 %v386
    %598 = vmatprep.subr.bf16.mxu0 %v391
    %599 = vmatpush1.bf16.msra.mxu0 %v390
    %600 = vmatprep.subr.bf16.mxu0 %v395
    %601 = vmatpush1.bf16.msra.mxu0 %v394
    %602 = vmatprep.subr.bf16.mxu0 %v399
    %603 = vmatpush1.bf16.msra.mxu0 %v398
    %604 = vmatprep.subr.bf16.mxu0 %v403
    %605 = vmatpush1.bf16.msra.mxu0 %v402
    %606 = vmatprep.subr.bf16.mxu0 %v407
    %607 = vmatpush1.bf16.msra.mxu0 %v406
    %608 = vmatprep.subr.bf16.mxu0 0
    %609 = vmatpush1.bf16.msra.mxu0 0
    %610 = vmatprep.subr.bf16.mxu0 0
    %611 = vmatpush1.bf16.msra.mxu0 0
    %612 = vmatprep.subr.bf16.mxu0 0
    %613 = vmatpush1.bf16.msra.mxu0 0
    %614 = vmatprep.subr.bf16.mxu0 0
    %615 = vmatpush1.bf16.msra.mxu0 0
    %616 = vmatprep.subr.bf16.mxu0 0
    %617 = vmatpush1.bf16.msra.mxu0 0
    %618 = vmatprep.subr.bf16.mxu0 0
    %619 = vmatpush1.bf16.msra.mxu0 0
    %620 = vmatprep.subr.bf16.mxu0 0
    %621 = vmatpush1.bf16.msra.mxu0 0
    %622 = vmatprep.subr.bf16.mxu0 0
    %623 = vmatpush1.bf16.msra.mxu0 0
    %624 = vmatprep.mubr.bf16.mxu0 0
    %625 = vmatmul.mubr.bf16.gmra.mrb[0].mxu0 %v550
    %v626 = vpop.f32.mrb[0].mxu0
    %v627 = vadd.f32 0.0, %v626
    %v628 = vpop.f32.mrb[0].mxu0
    %v629 = vadd.f32 0.0, %v628
    %v630 = vpop.f32.mrb[0].mxu0
    %v631 = vpop.f32.mrb[0].mxu0
    %632 = vdwg.mxu0
    %v637 = vrot.slane %v586, 7
    %v638 = vrot.slane %v588, 7
    %v639 = vrot.slane %v627, 7
    %v640 = vrot.slane %v629, 7
    %v645 = vadd.f32 %v198, %v637
    %v646 = vadd.f32 %v200, %v638
    %v647 = vadd.f32 %v239, %v639
    %v648 = vadd.f32 %v241, %v640
    %v649 = vxor.u32 %v645, 2147483648
    %v650 = vxor.u32 %v646, 2147483648
    %v651 = vxor.u32 %v647, 2147483648
    %v652 = vmul.f32 %v649, 1.442695
    %v653 = vpow.pop %v652
    %v654 = vmul.f32 %v650, 1.442695
    %v655 = vpow.pop %v654
    %v656 = vmul.f32 %v651, 1.442695
    %v657 = vpow.pop %v656
    %v658 = vadd.f32 %v653, 1.0
    %v659 = vadd.f32 %v655, 1.0
    %v660 = vadd.f32 %v657, 1.0
    %v661 = vrcp.pop %v658
    %v662 = vmul.f32 1.0, %v661
    %v663 = vrcp.pop %v659
    %v664 = vmul.f32 1.0, %v663
    %v665 = vrcp.pop %v660
    %v666 = vmul.f32 1.0, %v665
    %v667 = vtanh.pop %v648
    %v669 = vrot.slane %v547, 7
    %v671 = vmul.f32 %v664, %v669
    %v672 = vmul.f32 %v662, %v667
    %v673 = vadd.f32 %v671, %v672
    %v674 = vtanh.pop %v673
    %v675 = vmul.f32 %v666, %v674
    %v676 = vpack.c.bf16 %v675, %v675
    %v678 = vshrl.u32 %v676, 16
    %681 = vmatprep.subr.bf16.mxu0 %v377
    %682 = vmatpush1.bf16.msra.mxu0 %v376
    %683 = vmatprep.subr.bf16.mxu0 %v381
    %684 = vmatpush1.bf16.msra.mxu0 %v380
    %685 = vmatprep.subr.bf16.mxu0 %v385
    %686 = vmatpush1.bf16.msra.mxu0 %v384
    %687 = vmatprep.subr.bf16.mxu0 %v389
    %688 = vmatpush1.bf16.msra.mxu0 %v388
    %689 = vmatprep.subr.bf16.mxu0 %v393
    %690 = vmatpush1.bf16.msra.mxu0 %v392
    %691 = vmatprep.subr.bf16.mxu0 %v397
    %692 = vmatpush1.bf16.msra.mxu0 %v396
    %693 = vmatprep.subr.bf16.mxu0 %v401
    %694 = vmatpush1.bf16.msra.mxu0 %v400
    %695 = vmatprep.subr.bf16.mxu0 %v405
    %696 = vmatpush1.bf16.msra.mxu0 %v404
    %697 = vmatprep.subr.bf16.mxu0 0
    %698 = vmatpush1.bf16.msra.mxu0 0
    %699 = vmatprep.subr.bf16.mxu0 0
    %700 = vmatpush1.bf16.msra.mxu0 0
    %701 = vmatprep.subr.bf16.mxu0 0
    %702 = vmatpush1.bf16.msra.mxu0 0
    %703 = vmatprep.subr.bf16.mxu0 0
    %704 = vmatpush1.bf16.msra.mxu0 0
    %705 = vmatprep.subr.bf16.mxu0 0
    %706 = vmatpush1.bf16.msra.mxu0 0
    %707 = vmatprep.subr.bf16.mxu0 0
    %708 = vmatpush1.bf16.msra.mxu0 0
    %709 = vmatprep.subr.bf16.mxu0 0
    %710 = vmatpush1.bf16.msra.mxu0 0
    %711 = vmatprep.subr.bf16.mxu0 0
    %712 = vmatpush1.bf16.msra.mxu0 0
    %713 = vmatprep.mubr.bf16.mxu0 0
    %714 = vmatmul.mubr.bf16.gmra.mrb[0].mxu0 %v678
    %v715 = vpop.f32.mrb[0].mxu0
    %v716 = vadd.f32 0.0, %v715
    %v717 = vpop.f32.mrb[0].mxu0
    %v718 = vadd.f32 0.0, %v717
    %v719 = vpop.f32.mrb[0].mxu0
    %v720 = vpop.f32.mrb[0].mxu0
    %721 = vdwg.mxu0
    %722 = vmatprep.subr.bf16.mxu0 %v379
    %723 = vmatpush1.bf16.msra.mxu0 %v378
    %724 = vmatprep.subr.bf16.mxu0 %v383
    %725 = vmatpush1.bf16.msra.mxu0 %v382
    %726 = vmatprep.subr.bf16.mxu0 %v387
    %727 = vmatpush1.bf16.msra.mxu0 %v386
    %728 = vmatprep.subr.bf16.mxu0 %v391
    %729 = vmatpush1.bf16.msra.mxu0 %v390
    %730 = vmatprep.subr.bf16.mxu0 %v395
    %731 = vmatpush1.bf16.msra.mxu0 %v394
    %732 = vmatprep.subr.bf16.mxu0 %v399
    %733 = vmatpush1.bf16.msra.mxu0 %v398
    %734 = vmatprep.subr.bf16.mxu0 %v403
    %735 = vmatpush1.bf16.msra.mxu0 %v402
    %736 = vmatprep.subr.bf16.mxu0 %v407
    %737 = vmatpush1.bf16.msra.mxu0 %v406
    %738 = vmatprep.subr.bf16.mxu0 0
    %739 = vmatpush1.bf16.msra.mxu0 0
    %740 = vmatprep.subr.bf16.mxu0 0
    %741 = vmatpush1.bf16.msra.mxu0 0
    %742 = vmatprep.subr.bf16.mxu0 0
    %743 = vmatpush1.bf16.msra.mxu0 0
    %744 = vmatprep.subr.bf16.mxu0 0
    %745 = vmatpush1.bf16.msra.mxu0 0
    %746 = vmatprep.subr.bf16.mxu0 0
    %747 = vmatpush1.bf16.msra.mxu0 0
    %748 = vmatprep.subr.bf16.mxu0 0
    %749 = vmatpush1.bf16.msra.mxu0 0
    %750 = vmatprep.subr.bf16.mxu0 0
    %751 = vmatpush1.bf16.msra.mxu0 0
    %752 = vmatprep.subr.bf16.mxu0 0
    %753 = vmatpush1.bf16.msra.mxu0 0
    %754 = vmatprep.mubr.bf16.mxu0 0
    %755 = vmatmul.mubr.bf16.gmra.mrb[0].mxu0 %v678
    %v756 = vpop.f32.mrb[0].mxu0
    %v757 = vadd.f32 0.0, %v756
    %v758 = vpop.f32.mrb[0].mxu0
    %v759 = vadd.f32 0.0, %v758
    %v760 = vpop.f32.mrb[0].mxu0
    %v761 = vpop.f32.mrb[0].mxu0
    %762 = vdwg.mxu0
    %v767 = vrot.slane %v716, 6
    %v768 = vrot.slane %v718, 6
    %v769 = vrot.slane %v757, 6
    %v770 = vrot.slane %v759, 6
    %v775 = vadd.f32 %v198, %v767
    %v776 = vadd.f32 %v200, %v768
    %v777 = vadd.f32 %v239, %v769
    %v778 = vadd.f32 %v241, %v770
    %v779 = vxor.u32 %v775, 2147483648
    %v780 = vxor.u32 %v776, 2147483648
    %v781 = vxor.u32 %v777, 2147483648
    %v782 = vmul.f32 %v779, 1.442695
    %v783 = vpow.pop %v782
    %v784 = vmul.f32 %v780, 1.442695
    %v785 = vpow.pop %v784
    %v786 = vmul.f32 %v781, 1.442695
    %v787 = vpow.pop %v786
    %v788 = vadd.f32 %v783, 1.0
    %v789 = vadd.f32 %v785, 1.0
    %v790 = vadd.f32 %v787, 1.0
    %v791 = vrcp.pop %v788
    %v792 = vmul.f32 1.0, %v791
    %v793 = vrcp.pop %v789
    %v794 = vmul.f32 1.0, %v793
    %v795 = vrcp.pop %v790
    %v796 = vmul.f32 1.0, %v795
    %v797 = vtanh.pop %v778
    %v799 = vrot.slane %v673, 7
    %v801 = vmul.f32 %v794, %v799
    %v802 = vmul.f32 %v792, %v797
    %v803 = vadd.f32 %v801, %v802
    %v804 = vtanh.pop %v803
    %v805 = vmul.f32 %v796, %v804
    %v806 = vpack.c.bf16 %v805, %v805
    %v808 = vrot.slane %v806, 1
    %810 = vmatprep.subr.bf16.mxu0 %v377
    %811 = vmatpush1.bf16.msra.mxu0 %v376
    %812 = vmatprep.subr.bf16.mxu0 %v381
    %813 = vmatpush1.bf16.msra.mxu0 %v380
    %814 = vmatprep.subr.bf16.mxu0 %v385
    %815 = vmatpush1.bf16.msra.mxu0 %v384
    %816 = vmatprep.subr.bf16.mxu0 %v389
    %817 = vmatpush1.bf16.msra.mxu0 %v388
    %818 = vmatprep.subr.bf16.mxu0 %v393
    %819 = vmatpush1.bf16.msra.mxu0 %v392
    %820 = vmatprep.subr.bf16.mxu0 %v397
    %821 = vmatpush1.bf16.msra.mxu0 %v396
    %822 = vmatprep.subr.bf16.mxu0 %v401
    %823 = vmatpush1.bf16.msra.mxu0 %v400
    %824 = vmatprep.subr.bf16.mxu0 %v405
    %825 = vmatpush1.bf16.msra.mxu0 %v404
    %826 = vmatprep.subr.bf16.mxu0 0
    %827 = vmatpush1.bf16.msra.mxu0 0
    %828 = vmatprep.subr.bf16.mxu0 0
    %829 = vmatpush1.bf16.msra.mxu0 0
    %830 = vmatprep.subr.bf16.mxu0 0
    %831 = vmatpush1.bf16.msra.mxu0 0
    %832 = vmatprep.subr.bf16.mxu0 0
    %833 = vmatpush1.bf16.msra.mxu0 0
    %834 = vmatprep.subr.bf16.mxu0 0
    %835 = vmatpush1.bf16.msra.mxu0 0
    %836 = vmatprep.subr.bf16.mxu0 0
    %837 = vmatpush1.bf16.msra.mxu0 0
    %838 = vmatprep.subr.bf16.mxu0 0
    %839 = vmatpush1.bf16.msra.mxu0 0
    %840 = vmatprep.subr.bf16.mxu0 0
    %841 = vmatpush1.bf16.msra.mxu0 0
    %842 = vmatprep.mubr.bf16.mxu0 0
    %843 = vmatmul.mubr.bf16.gmra.mrb[0].mxu0 %v808
    %v844 = vpop.f32.mrb[0].mxu0
    %v845 = vadd.f32 0.0, %v844
    %v846 = vpop.f32.mrb[0].mxu0
    %v847 = vadd.f32 0.0, %v846
    %v848 = vpop.f32.mrb[0].mxu0
    %v849 = vpop.f32.mrb[0].mxu0
    %850 = vdwg.mxu0
    %851 = vmatprep.subr.bf16.mxu0 %v379
    %852 = vmatpush1.bf16.msra.mxu0 %v378
    %853 = vmatprep.subr.bf16.mxu0 %v383
    %854 = vmatpush1.bf16.msra.mxu0 %v382
    %855 = vmatprep.subr.bf16.mxu0 %v387
    %856 = vmatpush1.bf16.msra.mxu0 %v386
    %857 = vmatprep.subr.bf16.mxu0 %v391
    %858 = vmatpush1.bf16.msra.mxu0 %v390
    %859 = vmatprep.subr.bf16.mxu0 %v395
    %860 = vmatpush1.bf16.msra.mxu0 %v394
    %861 = vmatprep.subr.bf16.mxu0 %v399
    %862 = vmatpush1.bf16.msra.mxu0 %v398
    %863 = vmatprep.subr.bf16.mxu0 %v403
    %864 = vmatpush1.bf16.msra.mxu0 %v402
    %865 = vmatprep.subr.bf16.mxu0 %v407
    %866 = vmatpush1.bf16.msra.mxu0 %v406
    %867 = vmatprep.subr.bf16.mxu0 0
    %868 = vmatpush1.bf16.msra.mxu0 0
    %869 = vmatprep.subr.bf16.mxu0 0
    %870 = vmatpush1.bf16.msra.mxu0 0
    %871 = vmatprep.subr.bf16.mxu0 0
    %872 = vmatpush1.bf16.msra.mxu0 0
    %873 = vmatprep.subr.bf16.mxu0 0
    %874 = vmatpush1.bf16.msra.mxu0 0
    %875 = vmatprep.subr.bf16.mxu0 0
    %876 = vmatpush1.bf16.msra.mxu0 0
    %877 = vmatprep.subr.bf16.mxu0 0
    %878 = vmatpush1.bf16.msra.mxu0 0
    %879 = vmatprep.subr.bf16.mxu0 0
    %880 = vmatpush1.bf16.msra.mxu0 0
    %881 = vmatprep.subr.bf16.mxu0 0
    %882 = vmatpush1.bf16.msra.mxu0 0
    %883 = vmatprep.mubr.bf16.mxu0 0
    %884 = vmatmul.mubr.bf16.gmra.mrb[0].mxu0 %v808
    %v885 = vpop.f32.mrb[0].mxu0
    %v886 = vadd.f32 0.0, %v885
    %v887 = vpop.f32.mrb[0].mxu0
    %v888 = vadd.f32 0.0, %v887
    %v889 = vpop.f32.mrb[0].mxu0
    %v890 = vpop.f32.mrb[0].mxu0
    %891 = vdwg.mxu0
    %v896 = vrot.slane %v845, 5
    %v897 = vrot.slane %v847, 5
    %v898 = vrot.slane %v886, 5
    %v899 = vrot.slane %v888, 5
    %v904 = vadd.f32 %v198, %v896
    %v905 = vadd.f32 %v200, %v897
    %v906 = vadd.f32 %v239, %v898
    %v907 = vadd.f32 %v241, %v899
    %v908 = vxor.u32 %v904, 2147483648
    %v909 = vxor.u32 %v905, 2147483648
    %v910 = vxor.u32 %v906, 2147483648
    %v911 = vmul.f32 %v908, 1.442695
    %v912 = vpow.pop %v911
    %v913 = vmul.f32 %v909, 1.442695
    %v914 = vpow.pop %v913
    %v915 = vmul.f32 %v910, 1.442695
    %v916 = vpow.pop %v915
    %v917 = vadd.f32 %v912, 1.0
    %v918 = vadd.f32 %v914, 1.0
    %v919 = vadd.f32 %v916, 1.0
    %v920 = vrcp.pop %v917
    %v921 = vmul.f32 1.0, %v920
    %v922 = vrcp.pop %v918
    %v923 = vmul.f32 1.0, %v922
    %v924 = vrcp.pop %v919
    %v925 = vmul.f32 1.0, %v924
    %v926 = vtanh.pop %v907
    %v928 = vrot.slane %v803, 7
    %v930 = vmul.f32 %v923, %v928
    %v931 = vmul.f32 %v921, %v926
    %v932 = vadd.f32 %v930, %v931
    %v933 = vtanh.pop %v932
    %v934 = vmul.f32 %v925, %v933
    %v935 = vpack.c.bf16 %v934, %v934
    %v937 = vshrl.u32 %v935, 16
    %v939 = vrot.slane %v937, 1
    %941 = vmatprep.subr.bf16.mxu0 %v377
    %942 = vmatpush1.bf16.msra.mxu0 %v376
    %943 = vmatprep.subr.bf16.mxu0 %v381
    %944 = vmatpush1.bf16.msra.mxu0 %v380
    %945 = vmatprep.subr.bf16.mxu0 %v385
    %946 = vmatpush1.bf16.msra.mxu0 %v384
    %947 = vmatprep.subr.bf16.mxu0 %v389
    %948 = vmatpush1.bf16.msra.mxu0 %v388
    %949 = vmatprep.subr.bf16.mxu0 %v393
    %950 = vmatpush1.bf16.msra.mxu0 %v392
    %951 = vmatprep.subr.bf16.mxu0 %v397
    %952 = vmatpush1.bf16.msra.mxu0 %v396
    %953 = vmatprep.subr.bf16.mxu0 %v401
    %954 = vmatpush1.bf16.msra.mxu0 %v400
    %955 = vmatprep.subr.bf16.mxu0 %v405
    %956 = vmatpush1.bf16.msra.mxu0 %v404
    %957 = vmatprep.subr.bf16.mxu0 0
    %958 = vmatpush1.bf16.msra.mxu0 0
    %959 = vmatprep.subr.bf16.mxu0 0
    %960 = vmatpush1.bf16.msra.mxu0 0
    %961 = vmatprep.subr.bf16.mxu0 0
    %962 = vmatpush1.bf16.msra.mxu0 0
    %963 = vmatprep.subr.bf16.mxu0 0
    %964 = vmatpush1.bf16.msra.mxu0 0
    %965 = vmatprep.subr.bf16.mxu0 0
    %966 = vmatpush1.bf16.msra.mxu0 0
    %967 = vmatprep.subr.bf16.mxu0 0
    %968 = vmatpush1.bf16.msra.mxu0 0
    %969 = vmatprep.subr.bf16.mxu0 0
    %970 = vmatpush1.bf16.msra.mxu0 0
    %971 = vmatprep.subr.bf16.mxu0 0
    %972 = vmatpush1.bf16.msra.mxu0 0
    %973 = vmatprep.mubr.bf16.mxu0 0
    %974 = vmatmul.mubr.bf16.gmra.mrb[0].mxu0 %v939
    %v975 = vpop.f32.mrb[0].mxu0
    %v976 = vadd.f32 0.0, %v975
    %v977 = vpop.f32.mrb[0].mxu0
    %v978 = vadd.f32 0.0, %v977
    %v979 = vpop.f32.mrb[0].mxu0
    %v980 = vpop.f32.mrb[0].mxu0
    %981 = vdwg.mxu0
    %982 = vmatprep.subr.bf16.mxu0 %v379
    %983 = vmatpush1.bf16.msra.mxu0 %v378
    %984 = vmatprep.subr.bf16.mxu0 %v383
    %985 = vmatpush1.bf16.msra.mxu0 %v382
    %986 = vmatprep.subr.bf16.mxu0 %v387
    %987 = vmatpush1.bf16.msra.mxu0 %v386
    %988 = vmatprep.subr.bf16.mxu0 %v391
    %989 = vmatpush1.bf16.msra.mxu0 %v390
    %990 = vmatprep.subr.bf16.mxu0 %v395
    %991 = vmatpush1.bf16.msra.mxu0 %v394
    %992 = vmatprep.subr.bf16.mxu0 %v399
    %993 = vmatpush1.bf16.msra.mxu0 %v398
    %994 = vmatprep.subr.bf16.mxu0 %v403
    %995 = vmatpush1.bf16.msra.mxu0 %v402
    %996 = vmatprep.subr.bf16.mxu0 %v407
    %997 = vmatpush1.bf16.msra.mxu0 %v406
    %998 = vmatprep.subr.bf16.mxu0 0
    %999 = vmatpush1.bf16.msra.mxu0 0
    %1000 = vmatprep.subr.bf16.mxu0 0
    %1001 = vmatpush1.bf16.msra.mxu0 0
    %1002 = vmatprep.subr.bf16.mxu0 0
    %1003 = vmatpush1.bf16.msra.mxu0 0
    %1004 = vmatprep.subr.bf16.mxu0 0
    %1005 = vmatpush1.bf16.msra.mxu0 0
    %1006 = vmatprep.subr.bf16.mxu0 0
    %1007 = vmatpush1.bf16.msra.mxu0 0
    %1008 = vmatprep.subr.bf16.mxu0 0
    %1009 = vmatpush1.bf16.msra.mxu0 0
    %1010 = vmatprep.subr.bf16.mxu0 0
    %1011 = vmatpush1.bf16.msra.mxu0 0
    %1012 = vmatprep.subr.bf16.mxu0 0
    %1013 = vmatpush1.bf16.msra.mxu0 0
    %1014 = vmatprep.mubr.bf16.mxu0 0
    %1015 = vmatmul.mubr.bf16.gmra.mrb[0].mxu0 %v939
    %v1016 = vpop.f32.mrb[0].mxu0
    %v1017 = vadd.f32 0.0, %v1016
    %v1018 = vpop.f32.mrb[0].mxu0
    %v1019 = vadd.f32 0.0, %v1018
    %v1020 = vpop.f32.mrb[0].mxu0
    %v1021 = vpop.f32.mrb[0].mxu0
    %1022 = vdwg.mxu0
    %v1027 = vrot.slane %v976, 4
    %v1028 = vrot.slane %v978, 4
    %v1029 = vrot.slane %v1017, 4
    %v1030 = vrot.slane %v1019, 4
    %v1035 = vadd.f32 %v198, %v1027
    %v1036 = vadd.f32 %v200, %v1028
    %v1037 = vadd.f32 %v239, %v1029
    %v1038 = vadd.f32 %v241, %v1030
    %v1039 = vxor.u32 %v1035, 2147483648
    %v1040 = vxor.u32 %v1036, 2147483648
    %v1041 = vxor.u32 %v1037, 2147483648
    %v1042 = vmul.f32 %v1039, 1.442695
    %v1043 = vpow.pop %v1042
    %v1044 = vmul.f32 %v1040, 1.442695
    %v1045 = vpow.pop %v1044
    %v1046 = vmul.f32 %v1041, 1.442695
    %v1047 = vpow.pop %v1046
    %v1048 = vadd.f32 %v1043, 1.0
    %v1049 = vadd.f32 %v1045, 1.0
    %v1050 = vadd.f32 %v1047, 1.0
    %v1051 = vrcp.pop %v1048
    %v1052 = vmul.f32 1.0, %v1051
    %v1053 = vrcp.pop %v1049
    %v1054 = vmul.f32 1.0, %v1053
    %v1055 = vrcp.pop %v1050
    %v1056 = vmul.f32 1.0, %v1055
    %v1057 = vtanh.pop %v1038
    %v1059 = vrot.slane %v932, 7
    %v1061 = vmul.f32 %v1054, %v1059
    %v1062 = vmul.f32 %v1052, %v1057
    %v1063 = vadd.f32 %v1061, %v1062
    %v1064 = vtanh.pop %v1063
    %v1065 = vmul.f32 %v1056, %v1064
    %v1066 = vpack.c.bf16 %v1065, %v1065
    %v1068 = vrot.slane %v1066, 2
    %1070 = vmatprep.subr.bf16.mxu0 %v377
    %1071 = vmatpush1.bf16.msra.mxu0 %v376
    %1072 = vmatprep.subr.bf16.mxu0 %v381
    %1073 = vmatpush1.bf16.msra.mxu0 %v380
    %1074 = vmatprep.subr.bf16.mxu0 %v385
    %1075 = vmatpush1.bf16.msra.mxu0 %v384
    %1076 = vmatprep.subr.bf16.mxu0 %v389
    %1077 = vmatpush1.bf16.msra.mxu0 %v388
    %1078 = vmatprep.subr.bf16.mxu0 %v393
    %1079 = vmatpush1.bf16.msra.mxu0 %v392
    %1080 = vmatprep.subr.bf16.mxu0 %v397
    %1081 = vmatpush1.bf16.msra.mxu0 %v396
    %1082 = vmatprep.subr.bf16.mxu0 %v401
    %1083 = vmatpush1.bf16.msra.mxu0 %v400
    %1084 = vmatprep.subr.bf16.mxu0 %v405
    %1085 = vmatpush1.bf16.msra.mxu0 %v404
    %1086 = vmatprep.subr.bf16.mxu0 0
    %1087 = vmatpush1.bf16.msra.mxu0 0
    %1088 = vmatprep.subr.bf16.mxu0 0
    %1089 = vmatpush1.bf16.msra.mxu0 0
    %1090 = vmatprep.subr.bf16.mxu0 0
    %1091 = vmatpush1.bf16.msra.mxu0 0
    %1092 = vmatprep.subr.bf16.mxu0 0
    %1093 = vmatpush1.bf16.msra.mxu0 0
    %1094 = vmatprep.subr.bf16.mxu0 0
    %1095 = vmatpush1.bf16.msra.mxu0 0
    %1096 = vmatprep.subr.bf16.mxu0 0
    %1097 = vmatpush1.bf16.msra.mxu0 0
    %1098 = vmatprep.subr.bf16.mxu0 0
    %1099 = vmatpush1.bf16.msra.mxu0 0
    %1100 = vmatprep.subr.bf16.mxu0 0
    %1101 = vmatpush1.bf16.msra.mxu0 0
    %1102 = vmatprep.mubr.bf16.mxu0 0
    %1103 = vmatmul.mubr.bf16.gmra.mrb[0].mxu0 %v1068
    %v1104 = vpop.f32.mrb[0].mxu0
    %v1105 = vadd.f32 0.0, %v1104
    %v1106 = vpop.f32.mrb[0].mxu0
    %v1107 = vadd.f32 0.0, %v1106
    %v1108 = vpop.f32.mrb[0].mxu0
    %v1109 = vpop.f32.mrb[0].mxu0
    %1110 = vdwg.mxu0
    %1111 = vmatprep.subr.bf16.mxu0 %v379
    %1112 = vmatpush1.bf16.msra.mxu0 %v378
    %1113 = vmatprep.subr.bf16.mxu0 %v383
    %1114 = vmatpush1.bf16.msra.mxu0 %v382
    %1115 = vmatprep.subr.bf16.mxu0 %v387
    %1116 = vmatpush1.bf16.msra.mxu0 %v386
    %1117 = vmatprep.subr.bf16.mxu0 %v391
    %1118 = vmatpush1.bf16.msra.mxu0 %v390
    %1119 = vmatprep.subr.bf16.mxu0 %v395
    %1120 = vmatpush1.bf16.msra.mxu0 %v394
    %1121 = vmatprep.subr.bf16.mxu0 %v399
    %1122 = vmatpush1.bf16.msra.mxu0 %v398
    %1123 = vmatprep.subr.bf16.mxu0 %v403
    %1124 = vmatpush1.bf16.msra.mxu0 %v402
    %1125 = vmatprep.subr.bf16.mxu0 %v407
    %1126 = vmatpush1.bf16.msra.mxu0 %v406
    %1127 = vmatprep.subr.bf16.mxu0 0
    %1128 = vmatpush1.bf16.msra.mxu0 0
    %1129 = vmatprep.subr.bf16.mxu0 0
    %1130 = vmatpush1.bf16.msra.mxu0 0
    %1131 = vmatprep.subr.bf16.mxu0 0
    %1132 = vmatpush1.bf16.msra.mxu0 0
    %1133 = vmatprep.subr.bf16.mxu0 0
    %1134 = vmatpush1.bf16.msra.mxu0 0
    %1135 = vmatprep.subr.bf16.mxu0 0
    %1136 = vmatpush1.bf16.msra.mxu0 0
    %1137 = vmatprep.subr.bf16.mxu0 0
    %1138 = vmatpush1.bf16.msra.mxu0 0
    %1139 = vmatprep.subr.bf16.mxu0 0
    %1140 = vmatpush1.bf16.msra.mxu0 0
    %1141 = vmatprep.subr.bf16.mxu0 0
    %1142 = vmatpush1.bf16.msra.mxu0 0
    %1143 = vmatprep.mubr.bf16.mxu0 0
    %1144 = vmatmul.mubr.bf16.gmra.mrb[0].mxu0 %v1068
    %v1145 = vpop.f32.mrb[0].mxu0
    %v1146 = vadd.f32 0.0, %v1145
    %v1147 = vpop.f32.mrb[0].mxu0
    %v1148 = vadd.f32 0.0, %v1147
    %v1149 = vpop.f32.mrb[0].mxu0
    %v1150 = vpop.f32.mrb[0].mxu0
    %1151 = vdwg.mxu0
    %v1156 = vrot.slane %v1105, 3
    %v1157 = vrot.slane %v1107, 3
    %v1158 = vrot.slane %v1146, 3
    %v1159 = vrot.slane %v1148, 3
    %v1164 = vadd.f32 %v198, %v1156
    %v1165 = vadd.f32 %v200, %v1157
    %v1166 = vadd.f32 %v239, %v1158
    %v1167 = vadd.f32 %v241, %v1159
    %v1168 = vxor.u32 %v1164, 2147483648
    %v1169 = vxor.u32 %v1165, 2147483648
    %v1170 = vxor.u32 %v1166, 2147483648
    %v1171 = vmul.f32 %v1168, 1.442695
    %v1172 = vpow.pop %v1171
    %v1173 = vmul.f32 %v1169, 1.442695
    %v1174 = vpow.pop %v1173
    %v1175 = vmul.f32 %v1170, 1.442695
    %v1176 = vpow.pop %v1175
    %v1177 = vadd.f32 %v1172, 1.0
    %v1178 = vadd.f32 %v1174, 1.0
    %v1179 = vadd.f32 %v1176, 1.0
    %v1180 = vrcp.pop %v1177
    %v1181 = vmul.f32 1.0, %v1180
    %v1182 = vrcp.pop %v1178
    %v1183 = vmul.f32 1.0, %v1182
    %v1184 = vrcp.pop %v1179
    %v1185 = vmul.f32 1.0, %v1184
    %v1186 = vtanh.pop %v1167
    %v1188 = vrot.slane %v1063, 7
    %v1190 = vmul.f32 %v1183, %v1188
    %v1191 = vmul.f32 %v1181, %v1186
    %v1192 = vadd.f32 %v1190, %v1191
    %v1193 = vtanh.pop %v1192
    %v1194 = vmul.f32 %v1185, %v1193
    %v1195 = vpack.c.bf16 %v1194, %v1194
    %v1197 = vshrl.u32 %v1195, 16
    %v1199 = vrot.slane %v1197, 2
    %1201 = vmatprep.subr.bf16.mxu0 %v377
    %1202 = vmatpush1.bf16.msra.mxu0 %v376
    %1203 = vmatprep.subr.bf16.mxu0 %v381
    %1204 = vmatpush1.bf16.msra.mxu0 %v380
    %1205 = vmatprep.subr.bf16.mxu0 %v385
    %1206 = vmatpush1.bf16.msra.mxu0 %v384
    %1207 = vmatprep.subr.bf16.mxu0 %v389
    %1208 = vmatpush1.bf16.msra.mxu0 %v388
    %1209 = vmatprep.subr.bf16.mxu0 %v393
    %1210 = vmatpush1.bf16.msra.mxu0 %v392
    %1211 = vmatprep.subr.bf16.mxu0 %v397
    %1212 = vmatpush1.bf16.msra.mxu0 %v396
    %1213 = vmatprep.subr.bf16.mxu0 %v401
    %1214 = vmatpush1.bf16.msra.mxu0 %v400
    %1215 = vmatprep.subr.bf16.mxu0 %v405
    %1216 = vmatpush1.bf16.msra.mxu0 %v404
    %1217 = vmatprep.subr.bf16.mxu0 0
    %1218 = vmatpush1.bf16.msra.mxu0 0
    %1219 = vmatprep.subr.bf16.mxu0 0
    %1220 = vmatpush1.bf16.msra.mxu0 0
    %1221 = vmatprep.subr.bf16.mxu0 0
    %1222 = vmatpush1.bf16.msra.mxu0 0
    %1223 = vmatprep.subr.bf16.mxu0 0
    %1224 = vmatpush1.bf16.msra.mxu0 0
    %1225 = vmatprep.subr.bf16.mxu0 0
    %1226 = vmatpush1.bf16.msra.mxu0 0
    %1227 = vmatprep.subr.bf16.mxu0 0
    %1228 = vmatpush1.bf16.msra.mxu0 0
    %1229 = vmatprep.subr.bf16.mxu0 0
    %1230 = vmatpush1.bf16.msra.mxu0 0
    %1231 = vmatprep.subr.bf16.mxu0 0
    %1232 = vmatpush1.bf16.msra.mxu0 0
    %1233 = vmatprep.mubr.bf16.mxu0 0
    %1234 = vmatmul.mubr.bf16.gmra.mrb[0].mxu0 %v1199
    %v1235 = vpop.f32.mrb[0].mxu0
    %v1236 = vadd.f32 0.0, %v1235
    %v1237 = vpop.f32.mrb[0].mxu0
    %v1238 = vadd.f32 0.0, %v1237
    %v1239 = vpop.f32.mrb[0].mxu0
    %v1240 = vpop.f32.mrb[0].mxu0
    %1241 = vdwg.mxu0
    %1242 = vmatprep.subr.bf16.mxu0 %v379
    %1243 = vmatpush1.bf16.msra.mxu0 %v378
    %1244 = vmatprep.subr.bf16.mxu0 %v383
    %1245 = vmatpush1.bf16.msra.mxu0 %v382
    %1246 = vmatprep.subr.bf16.mxu0 %v387
    %1247 = vmatpush1.bf16.msra.mxu0 %v386
    %1248 = vmatprep.subr.bf16.mxu0 %v391
    %1249 = vmatpush1.bf16.msra.mxu0 %v390
    %1250 = vmatprep.subr.bf16.mxu0 %v395
    %1251 = vmatpush1.bf16.msra.mxu0 %v394
    %1252 = vmatprep.subr.bf16.mxu0 %v399
    %1253 = vmatpush1.bf16.msra.mxu0 %v398
    %1254 = vmatprep.subr.bf16.mxu0 %v403
    %1255 = vmatpush1.bf16.msra.mxu0 %v402
    %1256 = vmatprep.subr.bf16.mxu0 %v407
    %1257 = vmatpush1.bf16.msra.mxu0 %v406
    %1258 = vmatprep.subr.bf16.mxu0 0
    %1259 = vmatpush1.bf16.msra.mxu0 0
    %1260 = vmatprep.subr.bf16.mxu0 0
    %1261 = vmatpush1.bf16.msra.mxu0 0
    %1262 = vmatprep.subr.bf16.mxu0 0
    %1263 = vmatpush1.bf16.msra.mxu0 0
    %1264 = vmatprep.subr.bf16.mxu0 0
    %1265 = vmatpush1.bf16.msra.mxu0 0
    %1266 = vmatprep.subr.bf16.mxu0 0
    %1267 = vmatpush1.bf16.msra.mxu0 0
    %1268 = vmatprep.subr.bf16.mxu0 0
    %1269 = vmatpush1.bf16.msra.mxu0 0
    %1270 = vmatprep.subr.bf16.mxu0 0
    %1271 = vmatpush1.bf16.msra.mxu0 0
    %1272 = vmatprep.subr.bf16.mxu0 0
    %1273 = vmatpush1.bf16.msra.mxu0 0
    %1274 = vmatprep.mubr.bf16.mxu0 0
    %1275 = vmatmul.mubr.bf16.gmra.mrb[0].mxu0 %v1199
    %v1276 = vpop.f32.mrb[0].mxu0
    %v1277 = vadd.f32 0.0, %v1276
    %v1278 = vpop.f32.mrb[0].mxu0
    %v1279 = vadd.f32 0.0, %v1278
    %v1280 = vpop.f32.mrb[0].mxu0
    %v1281 = vpop.f32.mrb[0].mxu0
    %1282 = vdwg.mxu0
    %v1287 = vrot.slane %v1236, 2
    %v1288 = vrot.slane %v1238, 2
    %v1289 = vrot.slane %v1277, 2
    %v1290 = vrot.slane %v1279, 2
    %v1295 = vadd.f32 %v198, %v1287
    %v1296 = vadd.f32 %v200, %v1288
    %v1297 = vadd.f32 %v239, %v1289
    %v1298 = vadd.f32 %v241, %v1290
    %v1299 = vxor.u32 %v1295, 2147483648
    %v1300 = vxor.u32 %v1296, 2147483648
    %v1301 = vxor.u32 %v1297, 2147483648
    %v1302 = vmul.f32 %v1299, 1.442695
    %v1303 = vpow.pop %v1302
    %v1304 = vmul.f32 %v1300, 1.442695
    %v1305 = vpow.pop %v1304
    %v1306 = vmul.f32 %v1301, 1.442695
    %v1307 = vpow.pop %v1306
    %v1308 = vadd.f32 %v1303, 1.0
    %v1309 = vadd.f32 %v1305, 1.0
    %v1310 = vadd.f32 %v1307, 1.0
    %v1311 = vrcp.pop %v1308
    %v1312 = vmul.f32 1.0, %v1311
    %v1313 = vrcp.pop %v1309
    %v1314 = vmul.f32 1.0, %v1313
    %v1315 = vrcp.pop %v1310
    %v1316 = vmul.f32 1.0, %v1315
    %v1317 = vtanh.pop %v1298
    %v1319 = vrot.slane %v1192, 7
    %v1321 = vmul.f32 %v1314, %v1319
    %v1322 = vmul.f32 %v1312, %v1317
    %v1323 = vadd.f32 %v1321, %v1322
    %v1324 = vtanh.pop %v1323
    %v1325 = vmul.f32 %v1316, %v1324
    %v1326 = vpack.c.bf16 %v1325, %v1325
    %v1328 = vrot.slane %v1326, 3
    %1330 = vmatprep.subr.bf16.mxu0 %v377
    %1331 = vmatpush1.bf16.msra.mxu0 %v376
    %1332 = vmatprep.subr.bf16.mxu0 %v381
    %1333 = vmatpush1.bf16.msra.mxu0 %v380
    %1334 = vmatprep.subr.bf16.mxu0 %v385
    %1335 = vmatpush1.bf16.msra.mxu0 %v384
    %1336 = vmatprep.subr.bf16.mxu0 %v389
    %1337 = vmatpush1.bf16.msra.mxu0 %v388
    %1338 = vmatprep.subr.bf16.mxu0 %v393
    %1339 = vmatpush1.bf16.msra.mxu0 %v392
    %1340 = vmatprep.subr.bf16.mxu0 %v397
    %1341 = vmatpush1.bf16.msra.mxu0 %v396
    %1342 = vmatprep.subr.bf16.mxu0 %v401
    %1343 = vmatpush1.bf16.msra.mxu0 %v400
    %1344 = vmatprep.subr.bf16.mxu0 %v405
    %1345 = vmatpush1.bf16.msra.mxu0 %v404
    %1346 = vmatprep.subr.bf16.mxu0 0
    %1347 = vmatpush1.bf16.msra.mxu0 0
    %1348 = vmatprep.subr.bf16.mxu0 0
    %1349 = vmatpush1.bf16.msra.mxu0 0
    %1350 = vmatprep.subr.bf16.mxu0 0
    %1351 = vmatpush1.bf16.msra.mxu0 0
    %1352 = vmatprep.subr.bf16.mxu0 0
    %1353 = vmatpush1.bf16.msra.mxu0 0
    %1354 = vmatprep.subr.bf16.mxu0 0
    %1355 = vmatpush1.bf16.msra.mxu0 0
    %1356 = vmatprep.subr.bf16.mxu0 0
    %1357 = vmatpush1.bf16.msra.mxu0 0
    %1358 = vmatprep.subr.bf16.mxu0 0
    %1359 = vmatpush1.bf16.msra.mxu0 0
    %1360 = vmatprep.subr.bf16.mxu0 0
    %1361 = vmatpush1.bf16.msra.mxu0 0
    %1362 = vmatprep.mubr.bf16.mxu0 0
    %1363 = vmatmul.mubr.bf16.gmra.mrb[0].mxu0 %v1328
    %v1364 = vpop.f32.mrb[0].mxu0
    %v1365 = vadd.f32 0.0, %v1364
    %v1366 = vpop.f32.mrb[0].mxu0
    %v1367 = vadd.f32 0.0, %v1366
    %v1368 = vpop.f32.mrb[0].mxu0
    %v1369 = vpop.f32.mrb[0].mxu0
    %1370 = vdwg.mxu0
    %1371 = vmatprep.subr.bf16.mxu0 %v379
    %1372 = vmatpush1.bf16.msra.mxu0 %v378
    %1373 = vmatprep.subr.bf16.mxu0 %v383
    %1374 = vmatpush1.bf16.msra.mxu0 %v382
    %1375 = vmatprep.subr.bf16.mxu0 %v387
    %1376 = vmatpush1.bf16.msra.mxu0 %v386
    %1377 = vmatprep.subr.bf16.mxu0 %v391
    %1378 = vmatpush1.bf16.msra.mxu0 %v390
    %1379 = vmatprep.subr.bf16.mxu0 %v395
    %1380 = vmatpush1.bf16.msra.mxu0 %v394
    %1381 = vmatprep.subr.bf16.mxu0 %v399
    %1382 = vmatpush1.bf16.msra.mxu0 %v398
    %1383 = vmatprep.subr.bf16.mxu0 %v403
    %1384 = vmatpush1.bf16.msra.mxu0 %v402
    %1385 = vmatprep.subr.bf16.mxu0 %v407
    %1386 = vmatpush1.bf16.msra.mxu0 %v406
    %1387 = vmatprep.subr.bf16.mxu0 0
    %1388 = vmatpush1.bf16.msra.mxu0 0
    %1389 = vmatprep.subr.bf16.mxu0 0
    %1390 = vmatpush1.bf16.msra.mxu0 0
    %1391 = vmatprep.subr.bf16.mxu0 0
    %1392 = vmatpush1.bf16.msra.mxu0 0
    %1393 = vmatprep.subr.bf16.mxu0 0
    %1394 = vmatpush1.bf16.msra.mxu0 0
    %1395 = vmatprep.subr.bf16.mxu0 0
    %1396 = vmatpush1.bf16.msra.mxu0 0
    %1397 = vmatprep.subr.bf16.mxu0 0
    %1398 = vmatpush1.bf16.msra.mxu0 0
    %1399 = vmatprep.subr.bf16.mxu0 0
    %1400 = vmatpush1.bf16.msra.mxu0 0
    %1401 = vmatprep.subr.bf16.mxu0 0
    %1402 = vmatpush1.bf16.msra.mxu0 0
    %1403 = vmatprep.mubr.bf16.mxu0 0
    %1404 = vmatmul.mubr.bf16.gmra.mrb[0].mxu0 %v1328
    %v1405 = vpop.f32.mrb[0].mxu0
    %v1406 = vadd.f32 0.0, %v1405
    %v1407 = vpop.f32.mrb[0].mxu0
    %v1408 = vadd.f32 0.0, %v1407
    %v1409 = vpop.f32.mrb[0].mxu0
    %v1410 = vpop.f32.mrb[0].mxu0
    %1411 = vdwg.mxu0
    %v1416 = vrot.slane %v1365, 1
    %v1417 = vrot.slane %v1367, 1
    %v1418 = vrot.slane %v1406, 1
    %v1419 = vrot.slane %v1408, 1
    %v1424 = vadd.f32 %v198, %v1416
    %v1425 = vadd.f32 %v200, %v1417
    %v1426 = vadd.f32 %v239, %v1418
    %v1427 = vadd.f32 %v241, %v1419
    %v1428 = vxor.u32 %v1424, 2147483648
    %v1429 = vxor.u32 %v1425, 2147483648
    %v1430 = vxor.u32 %v1426, 2147483648
    %v1431 = vmul.f32 %v1428, 1.442695
    %v1432 = vpow.pop %v1431
    %v1433 = vmul.f32 %v1429, 1.442695
    %v1434 = vpow.pop %v1433
    %v1435 = vmul.f32 %v1430, 1.442695
    %v1436 = vpow.pop %v1435
    %v1437 = vadd.f32 %v1432, 1.0
    %v1438 = vadd.f32 %v1434, 1.0
    %v1439 = vadd.f32 %v1436, 1.0
    %v1440 = vrcp.pop %v1437
    %v1441 = vmul.f32 1.0, %v1440
    %v1442 = vrcp.pop %v1438
    %v1443 = vmul.f32 1.0, %v1442
    %v1444 = vrcp.pop %v1439
    %v1445 = vmul.f32 1.0, %v1444
    %v1446 = vtanh.pop %v1427
    %v1448 = vrot.slane %v1323, 7
    %v1450 = vmul.f32 %v1443, %v1448
    %v1451 = vmul.f32 %v1441, %v1446
    %v1452 = vadd.f32 %v1450, %v1451
    %v1453 = vtanh.pop %v1452
    %v1454 = vmul.f32 %v1445, %v1453
    %vm1455 = vcmask 1040384
    %v1456 = vsel %vm1455, %v549, %v675
    %vm1457 = vcmask 1041408
    %v1458 = vsel %vm1457, %v1456, %v805
    %vm1459 = vcmask 1042432
    %v1460 = vsel %vm1459, %v1458, %v934
    %vm1461 = vcmask 1043456
    %v1462 = vsel %vm1461, %v1460, %v1065
    %vm1463 = vcmask 1044480
    %v1464 = vsel %vm1463, %v1462, %v1194
    %vm1465 = vcmask 1045504
    %v1466 = vsel %vm1465, %v1464, %v1325
    %vm1467 = vcmask 1046528
    %v1468 = vsel %vm1467, %v1466, %v1454
    %v1469 = vpack.c.bf16 %v1468, %v1468
    %v1470 = vld [vmem:[#allocation8] sm:$0xf]
    %v1471 = vld [vmem:[#allocation8 + $0x4] sm:$0xf]
    %v1472 = vld [vmem:[#allocation8 + $0x8] sm:$0xf]
    %v1473 = vld [vmem:[#allocation8 + $0xc] sm:$0xf]
    %v1474 = vld [vmem:[#allocation8 + $0x10] sm:$0xf]
    %v1475 = vld [vmem:[#allocation8 + $0x14] sm:$0xf]
    %v1476 = vld [vmem:[#allocation8 + $0x18] sm:$0xf]
    %v1477 = vld [vmem:[#allocation8 + $0x1c] sm:$0xf]
    %v1478 = vld [vmem:[#allocation8 + $0x20] sm:$0xf]
    %v1479 = vld [vmem:[#allocation8 + $0x24] sm:$0xf]
    %v1480 = vld [vmem:[#allocation8 + $0x28] sm:$0xf]
    %v1481 = vld [vmem:[#allocation8 + $0x2c] sm:$0xf]
    %v1482 = vld [vmem:[#allocation8 + $0x30] sm:$0xf]
    %v1483 = vld [vmem:[#allocation8 + $0x34] sm:$0xf]
    %v1484 = vld [vmem:[#allocation8 + $0x38] sm:$0xf]
    %v1485 = vld [vmem:[#allocation8 + $0x3c] sm:$0xf]
    %v1486 = vld [vmem:[%s7] sm:$0x1]
    %v1488 = vlaneseq
    %v1489 = vshrl.u32 %v1488, 7
    %v1490 = vsub.s32 0, %v1489
    %v1491 = vrot.slane %v1486, %v1490
    %v1509 = vunpack.c.l.b16 %v1470
    %v1510 = vunpack.c.l.b16 %v1471
    %v1511 = vunpack.c.l.b16 %v1472
    %v1512 = vunpack.c.l.b16 %v1473
    %v1513 = vunpack.c.l.b16 %v1474
    %v1514 = vunpack.c.l.b16 %v1475
    %v1515 = vunpack.c.l.b16 %v1476
    %v1516 = vunpack.c.l.b16 %v1477
    %v1517 = vunpack.c.l.b16 %v1478
    %v1518 = vunpack.c.l.b16 %v1479
    %v1519 = vunpack.c.l.b16 %v1480
    %v1520 = vunpack.c.l.b16 %v1481
    %v1521 = vunpack.c.l.b16 %v1482
    %v1522 = vunpack.c.l.b16 %v1483
    %v1523 = vunpack.c.l.b16 %v1484
    %v1524 = vunpack.c.l.b16 %v1485
    %v1525 = vpack.c.b16 %v1510, %v1509
    %v1526 = vpack.c.b16 %v1512, %v1511
    %v1527 = vpack.c.b16 %v1514, %v1513
    %v1528 = vpack.c.b16 %v1516, %v1515
    %v1529 = vpack.c.b16 %v1518, %v1517
    %v1530 = vpack.c.b16 %v1520, %v1519
    %v1531 = vpack.c.b16 %v1522, %v1521
    %v1532 = vpack.c.b16 %v1524, %v1523
    %1541 = vmatprep.subr.bf16.mxu0 0
    %1542 = vmatpush1.bf16.msra.mxu0 %v1525
    %1543 = vmatprep.subr.bf16.mxu0 0
    %1544 = vmatpush1.bf16.msra.mxu0 %v1526
    %1545 = vmatprep.subr.bf16.mxu0 0
    %1546 = vmatpush1.bf16.msra.mxu0 %v1527
    %1547 = vmatprep.subr.bf16.mxu0 0
    %1548 = vmatpush1.bf16.msra.mxu0 %v1528
    %1549 = vmatprep.subr.bf16.mxu0 0
    %1550 = vmatpush1.bf16.msra.mxu0 %v1529
    %1551 = vmatprep.subr.bf16.mxu0 0
    %1552 = vmatpush1.bf16.msra.mxu0 %v1530
    %1553 = vmatprep.subr.bf16.mxu0 0
    %1554 = vmatpush1.bf16.msra.mxu0 %v1531
    %1555 = vmatprep.subr.bf16.mxu0 0
    %1556 = vmatpush1.bf16.msra.mxu0 %v1532
    %1557 = vmatprep.subr.bf16.mxu0 0
    %1558 = vmatpush1.bf16.msra.mxu0 0
    %1559 = vmatprep.subr.bf16.mxu0 0
    %1560 = vmatpush1.bf16.msra.mxu0 0
    %1561 = vmatprep.subr.bf16.mxu0 0
    %1562 = vmatpush1.bf16.msra.mxu0 0
    %1563 = vmatprep.subr.bf16.mxu0 0
    %1564 = vmatpush1.bf16.msra.mxu0 0
    %1565 = vmatprep.subr.bf16.mxu0 0
    %1566 = vmatpush1.bf16.msra.mxu0 0
    %1567 = vmatprep.subr.bf16.mxu0 0
    %1568 = vmatpush1.bf16.msra.mxu0 0
    %1569 = vmatprep.subr.bf16.mxu0 0
    %1570 = vmatpush1.bf16.msra.mxu0 0
    %1571 = vmatprep.subr.bf16.mxu0 0
    %1572 = vmatpush1.bf16.msra.mxu0 0
    %1573 = vmatprep.mubr.bf16.mxu0 0
    %1574 = vmatmul.mubr.bf16.gmra.mrb[0].mxu0 %v1469
    %v1575 = vpop.f32.mrb[0].mxu0
    %v1576 = vadd.f32 %v1491, %v1575
    %v1577 = vpop.f32.mrb[0].mxu0
    %v1578 = vpop.f32.mrb[0].mxu0
    %v1579 = vpop.f32.mrb[0].mxu0
    %1580 = vdwg.mxu0
    %1581 = vst [vmem:[#allocation10] sm:$0xff] %v1576
    %1582 = vst [vmem:[#allocation11 - $0x7] sm:$0x80] %v1454
    %1583 = vst [vmem:[#allocation13 - $0x7] sm:$0x80] %v1452
    // Predicated region
    $region50: #{tpu_custom_call.1} parent=1 // pred_check
      _
    $region51: #{tpu_custom_call.1} parent=1 // pred_check_branch
      %1585 = sbr.rel (0) target = $region53
    $region52: #{tpu_custom_call.1} parent=1 // pred_region
      %s1587 = ssub.s32 128, 128
      %1588 = vsyncadd [#allocation4], %s1587
      %s1590 = sshll.u32 [#allocation10], 4
      %s1591 = int_to_ptr.vmem [resolvable:$true] %s1590
      %1593 = dma.vmem_to_hbm [thread:$0]  %s1591, 128, %s8, [#allocation4]
    $region53: #{tpu_custom_call.1} parent=1 // pred_fallthru
      _
    // Predicated region
    $region54: #{tpu_custom_call.1} parent=1 // pred_check
      _
    $region55: #{tpu_custom_call.1} parent=1 // pred_check_branch
      %1595 = sbr.rel (0) target = $region57
    $region56: #{tpu_custom_call.1} parent=1 // pred_region
      %s1597 = ssub.s32 16, 16
      %1598 = vsyncadd [#allocation12], %s1597
      %s1600 = sshll.u32 [#allocation11], 4
      %s1601 = int_to_ptr.vmem [resolvable:$true] %s1600
      %1603 = dma.vmem_to_hbm [thread:$0]  %s1601, 16, %s9, [#allocation12]
    $region57: #{tpu_custom_call.1} parent=1 // pred_fallthru
      _
    // Predicated region
    $region58: #{tpu_custom_call.1} parent=1 // pred_check
      _
    $region59: #{tpu_custom_call.1} parent=1 // pred_check_branch
      %1605 = sbr.rel (0) target = $region61
    $region60: #{tpu_custom_call.1} parent=1 // pred_region
      %s1607 = ssub.s32 16, 16
      %1608 = vsyncadd [#allocation12], %s1607
      %s1610 = sshll.u32 [#allocation13], 4
      %s1611 = int_to_ptr.vmem [resolvable:$true] %s1610
      %1613 = dma.vmem_to_hbm [thread:$0]  %s1611, 16, %s10, [#allocation12]
    $region61: #{tpu_custom_call.1} parent=1 // pred_fallthru
      _
    // Predicated region
    $region62: #{tpu_custom_call.1} parent=1 // pred_check
      _
    $region63: #{tpu_custom_call.1} parent=1 // pred_check_branch
      %1615 = sbr.rel (0) target = $region65
    $region64: #{tpu_custom_call.1} parent=1 // pred_region
      %1616 = dma.done [#allocation4], 128
    $region65: #{tpu_custom_call.1} parent=1 // pred_fallthru
      _
    // Predicated region
    $region66: #{tpu_custom_call.1} parent=1 // pred_check
      _
    $region67: #{tpu_custom_call.1} parent=1 // pred_check_branch
      %1618 = sbr.rel (0) target = $region69
    $region68: #{tpu_custom_call.1} parent=1 // pred_region
      %1619 = dma.done [#allocation12], 16
    $region69: #{tpu_custom_call.1} parent=1 // pred_fallthru
      _
    // Predicated region
    $region70: #{tpu_custom_call.1} parent=1 // pred_check
      _
    $region71: #{tpu_custom_call.1} parent=1 // pred_check_branch
      %1621 = sbr.rel (0) target = $region73
    $region72: #{tpu_custom_call.1} parent=1 // pred_region
      %1622 = dma.done [#allocation12], 16
    $region73: #{tpu_custom_call.1} parent=1 // pred_fallthru
      _
    %1623 = vsyncpa [#allocation3], 1
    %1624 = vsyncpa [#allocation6], 1
    %1625 = vsyncpa [#allocation9], 1
    %1626 = vsyncpa [#allocation4], 1
    %1627 = vsyncpa [#allocation12], 1

</llo_original>
